<compile_context>
chip_gen: v7x
topology: tpu7x:2x2x1
jax: 0.10.0
libtpu: 0.0.40
codegen_flags: <defaults>
</compile_context>

<pallas_src>
import functools

import jax
import jax.numpy as jnp
from jax.experimental import pallas as pl
from jax.experimental.pallas import tpu as pltpu


def _round_up(x, m):
    return ((x + m - 1) // m) * m


def _vmem_budget():
    """Generation-aware VMEM sizing (v5e/v6e: 128 MiB physical, v7x: 64 MiB)."""
    cap = 64 * 1024 * 1024                     # conservative default (v7x)
    try:
        info = pltpu.get_tpu_info()
        cap = int(getattr(info, "vmem_capacity_bytes", cap))
    except Exception:
        pass
    limit = max(min(cap - 16 * 1024 * 1024, int(cap * 0.85)), 32 * 1024 * 1024)
    budget = max(limit - 6 * 1024 * 1024, 24 * 1024 * 1024)
    return budget, limit


def _row_tile_candidates(n_pad):
    """Row tiles that are multiples of 128 and divide n_pad (largest first)."""
    k = n_pad // 128
    divs = sorted((d for d in range(1, k + 1) if k % d == 0), reverse=True)
    return [d * 128 for d in divs if d * 128 <= 2048]


def _fused_footprint(n_pad, h_pad, c_pad, tm, itemsize):
    resident = (n_pad * n_pad + n_pad * h_pad + h_pad * c_pad) * itemsize
    resident += (h_pad + c_pad) * 4            # biases (f32)
    scratch = n_pad * c_pad * itemsize         # s2 scratch
    out_bufs = 2 * tm * c_pad * 4              # double-buffered output tile
    temps = 2 * tm * (h_pad + c_pad) * 4       # f32 intermediates margin
    return resident + scratch + out_bufs + temps


def _split_footprint(n_pad, h_pad, c_pad, tm, itemsize):
    adj_bufs = 2 * tm * n_pad * itemsize       # streamed, double-buffered adj
    call1 = (adj_bufs + (n_pad * h_pad + h_pad * c_pad) * itemsize + h_pad * 4
             + 2 * tm * c_pad * itemsize + 2 * tm * (h_pad + c_pad) * 4)
    call2 = (adj_bufs + n_pad * c_pad * itemsize + c_pad * 4
             + 2 * tm * c_pad * 4 + 3 * tm * c_pad * 4)
    return max(call1, call2)


# ----------------------------------------------------------------------------
# Kernels
# ----------------------------------------------------------------------------
def _fused_kernel(adj_ref, s1_ref, w2_ref, b1_ref, b2_ref, out_ref, s2_ref, *,
                  n_class, row_tile):
    """Both GCN layers + log_softmax; adj resident in VMEM, read from HBM once."""
    p = pl.program_id(0)               # 0: layer 1, 1: layer 2 + log_softmax
    i = pl.program_id(1)               # row tile
    row0 = pl.multiple_of(i * row_tile, row_tile)
    cdt = s2_ref.dtype

    @pl.when(p == 0)
    def _layer1():
        a = adj_ref[pl.ds(row0, row_tile), :]
        h = jnp.dot(a, s1_ref[...], preferred_element_type=jnp.float32)
        h = jnp.maximum(h + b1_ref[...], 0.0)
        # dropout(training=False) -> identity
        s2_ref[pl.ds(row0, row_tile), :] = jnp.dot(
            h.astype(cdt), w2_ref[...],
            preferred_element_type=jnp.float32).astype(cdt)
        # Keep the output block well-defined during phase 0 so its writeback
        # never flushes uninitialized VMEM (robust vs. the old index-map trick).
        out_ref[...] = jnp.zeros_like(out_ref)

    @pl.when(p == 1)
    def _layer2():
        a = adj_ref[pl.ds(row0, row_tile), :]
        logits = jnp.dot(a, s2_ref[...], preferred_element_type=jnp.float32)
        logits = logits + b2_ref[...]
        col = jax.lax.broadcasted_iota(jnp.int32, logits.shape, 1)
        logits = jnp.where(col < n_class, logits, -1e30)
        m = jnp.max(logits, axis=1, keepdims=True)
        shifted = logits - m
        lse = jnp.log(jnp.sum(jnp.exp(shifted), axis=1, keepdims=True))
        out_ref[...] = (shifted - lse).astype(out_ref.dtype)


def _layer1_kernel(adj_ref, s1_ref, w2_ref, b1_ref, s2_ref):
    """Streamed adj: s2_tile = relu(adj_tile @ s1 + b1) @ W2."""
    cdt = s2_ref.dtype
    h = jnp.dot(adj_ref[...], s1_ref[...], preferred_element_type=jnp.float32)
    h = jnp.maximum(h + b1_ref[...], 0.0)
    s2_ref[...] = jnp.dot(h.astype(cdt), w2_ref[...],
                          preferred_element_type=jnp.float32).astype(cdt)


def _layer2_kernel(adj_ref, s2_ref, b2_ref, out_ref, *, n_class):
    """Streamed adj: logits = adj_tile @ s2 + b2; masked log_softmax."""
    logits = jnp.dot(adj_ref[...], s2_ref[...],
                     preferred_element_type=jnp.float32) + b2_ref[...]
    col = jax.lax.broadcasted_iota(jnp.int32, logits.shape, 1)
    logits = jnp.where(col < n_class, logits, -1e30)
    m = jnp.max(logits, axis=1, keepdims=True)
    shifted = logits - m
    lse = jnp.log(jnp.sum(jnp.exp(shifted), axis=1, keepdims=True))
    out_ref[...] = (shifted - lse).astype(out_ref.dtype)


# ----------------------------------------------------------------------------
# Launch helpers
# ----------------------------------------------------------------------------
def _invariant_spec(shape, vmem_resident):
    """Grid-invariant operand: whole array resident in VMEM (single-buffered,
    DMA'd once).  Fallback: ordinary full-block spec with constant index map."""
    if vmem_resident:
        return pl.BlockSpec(memory_space=pltpu.MemorySpace.VMEM)
    nd = len(shape)
    return pl.BlockSpec(shape, lambda *_: (0,) * nd)


def _run_with_vmem_fallback(launch):
    try:
        return jax.block_until_ready(launch(True))
    except Exception:
        return jax.block_until_ready(launch(False))


def _launch_fused(adj_p, s1_p, w2_p, b1_p, b2_p, *, tm, n_class, compute_dtype,
                  vmem_limit):
    n_pad = adj_p.shape[0]
    h_pad = s1_p.shape[1]
    c_pad = w2_p.shape[1]
    n_tiles = n_pad // tm
    itemsize = jnp.dtype(compute_dtype).itemsize

    kernel = functools.partial(_fused_kernel, n_class=n_class, row_tile=tm)
    cost = pl.CostEstimate(
        flops=2 * n_pad * n_pad * (h_pad + c_pad) + 2 * n_pad * h_pad * c_pad,
        transcendentals=n_pad * (c_pad + 1),
        bytes_accessed=((n_pad * n_pad + n_pad * h_pad + h_pad * c_pad) * itemsize
                        + (h_pad + c_pad) * 4 + n_pad * c_pad * 4))

    def launch(vmem_resident):
        return pl.pallas_call(
            kernel,
            out_shape=jax.ShapeDtypeStruct((n_pad, c_pad), jnp.float32),
            grid=(2, n_tiles),
            in_specs=[
                _invariant_spec((n_pad, n_pad), vmem_resident),  # adj (read once)
                _invariant_spec((n_pad, h_pad), vmem_resident),  # s1 = X @ W1
                _invariant_spec((h_pad, c_pad), vmem_resident),  # W2
                _invariant_spec((1, h_pad), vmem_resident),      # b1
                _invariant_spec((1, c_pad), vmem_resident),      # b2
            ],
            out_specs=pl.BlockSpec((tm, c_pad), lambda p, i: (i, 0)),
            scratch_shapes=[pltpu.VMEM((n_pad, c_pad), compute_dtype)],  # s2
            compiler_params=pltpu.CompilerParams(
                dimension_semantics=("arbitrary", "arbitrary"),
                vmem_limit_bytes=vmem_limit),
            cost_estimate=cost,
        )(adj_p, s1_p, w2_p, b1_p, b2_p)

    return _run_with_vmem_fallback(launch)


def _launch_split(adj_p, s1_p, w2_p, b1_p, b2_p, *, tm, n_class, compute_dtype,
                  vmem_limit):
    n_pad = adj_p.shape[0]
    h_pad = s1_p.shape[1]
    c_pad = w2_p.shape[1]
    n_tiles = n_pad // tm
    itemsize = jnp.dtype(compute_dtype).itemsize

    cost1 = pl.CostEstimate(
        flops=2 * n_pad * n_pad * h_pad + 2 * n_pad * h_pad * c_pad,
        transcendentals=0,
        bytes_accessed=(n_pad * n_pad + n_pad * h_pad + h_pad * c_pad
                        + n_pad * c_pad) * itemsize)
    cost2 = pl.CostEstimate(
        flops=2 * n_pad * n_pad * c_pad,
        transcendentals=n_pad * (c_pad + 1),
        bytes_accessed=(n_pad * n_pad + n_pad * c_pad) * itemsize
                       + n_pad * c_pad * 4)

    def launch1(vmem_resident):
        return pl.pallas_call(
            _layer1_kernel,
            out_shape=jax.ShapeDtypeStruct((n_pad, c_pad), compute_dtype),
            grid=(n_tiles,),
            in_specs=[
                pl.BlockSpec((tm, n_pad), lambda i: (i, 0)),     # adj row tile
                _invariant_spec((n_pad, h_pad), vmem_resident),  # s1
                _invariant_spec((h_pad, c_pad), vmem_resident),  # W2
                _invariant_spec((1, h_pad), vmem_resident),      # b1
            ],
            out_specs=pl.BlockSpec((tm, c_pad), lambda i: (i, 0)),
            compiler_params=pltpu.CompilerParams(
                dimension_semantics=("parallel",),
                vmem_limit_bytes=vmem_limit),
            cost_estimate=cost1,
        )(adj_p, s1_p, w2_p, b1_p)

    s2 = _run_with_vmem_fallback(launch1)

    kernel2 = functools.partial(_layer2_kernel, n_class=n_class)

    def launch2(vmem_resident):
        return pl.pallas_call(
            kernel2,
            out_shape=jax.ShapeDtypeStruct((n_pad, c_pad), jnp.float32),
            grid=(n_tiles,),
            in_specs=[
                pl.BlockSpec((tm, n_pad), lambda i: (i, 0)),     # adj row tile
                _invariant_spec((n_pad, c_pad), vmem_resident),  # s2
                _invariant_spec((1, c_pad), vmem_resident),      # b2
            ],
            out_specs=pl.BlockSpec((tm, c_pad), lambda i: (i, 0)),
            compiler_params=pltpu.CompilerParams(
                dimension_semantics=("parallel",),
                vmem_limit_bytes=vmem_limit),
            cost_estimate=cost2,
        )(adj_p, s2, b2_p)

    return _run_with_vmem_fallback(launch2)


# ----------------------------------------------------------------------------
# Public forward
# ----------------------------------------------------------------------------
def fastgcn_forward(feature, adj, params, *, compute_dtype=jnp.bfloat16,
                    force_split=False):
    """FastGCN forward in inference mode (dropout is identity)."""
    w1, b1, w2, b2 = params["w1"], params["b1"], params["w2"], params["b2"]
    n, _ = feature.shape
    h_dim = w1.shape[1]
    c_dim = w2.shape[1]

    h_pad = _round_up(h_dim, 128)
    c_pad = _round_up(c_dim, 128)
    n_pad = _round_up(n, 128)          # pad N only to 128, never to the tile
    itemsize = jnp.dtype(compute_dtype).itemsize
    cdt = compute_dtype

    # Hoisted out of the kernel: support1 = feature @ W1 (bf16 MXU inputs, f32
    # accumulate).  Removes the serial first-iteration bubble and frees the
    # feature block + W1 from kernel VMEM.
    s1 = jnp.dot(feature.astype(cdt), w1.astype(cdt),
                 preferred_element_type=jnp.float32)

    def pad2(x, r, c):
        return jnp.pad(x, ((0, r - x.shape[0]), (0, c - x.shape[1])))

    s1_p = pad2(s1, n_pad, h_pad).astype(cdt)
    adj_p = pad2(adj, n_pad, n_pad).astype(cdt)
    w2_p = pad2(w2, h_pad, c_pad).astype(cdt)
    b1_p = pad2(b1.reshape(1, -1).astype(jnp.float32), 1, h_pad)
    b2_p = pad2(b2.reshape(1, -1).astype(jnp.float32), 1, c_pad)

    budget, vmem_limit = _vmem_budget()
    cands = _row_tile_candidates(n_pad)

    tm_fused = next(
        (t for t in cands
         if _fused_footprint(n_pad, h_pad, c_pad, t, itemsize) <= budget), None)

    if tm_fused is not None and not force_split:
        # adj fits in VMEM: single fused call, adj read from HBM exactly once.
        out_pad = _launch_fused(adj_p, s1_p, w2_p, b1_p, b2_p,
                                tm=tm_fused, n_class=c_dim,
                                compute_dtype=cdt, vmem_limit=vmem_limit)
    else:
        # adj streamed in row tiles; two calls so the row axis is "parallel"
        # (both v7x TensorCores).  s2 round-trips via HBM (n_pad x c_pad bf16,
        # negligible vs. the N^2 adj stream).
        tm_split = next(
            (t for t in cands
             if _split_footprint(n_pad, h_pad, c_pad, t, itemsize) <= budget),
            cands[-1])
        # TODO(synk): if even tm=128 exceeds the budget (s1/s2 slabs too big),
        #             add K-tiling over the contraction (node) dimension.
        out_pad = _launch_split(adj_p, s1_p, w2_p, b1_p, b2_p,
                                tm=tm_split, n_class=c_dim,
                                compute_dtype=cdt, vmem_limit=vmem_limit)

    return out_pad[:n, :c_dim]


def init_params(key, n_feature, n_hidden, n_class):
    """Kipf GraphConvolution reset_parameters: uniform(-stdv, stdv),
    stdv = 1/sqrt(out_features)."""
    k1, k2, k3, k4 = jax.random.split(key, 4)
    s1 = 1.0 / jnp.sqrt(jnp.float32(n_hidden))
    s2 = 1.0 / jnp.sqrt(jnp.float32(n_class))
    w1 = jax.random.uniform(k1, (n_feature, n_hidden), jnp.float32, -s1, s1)
    b1 = jax.random.uniform(k2, (1, n_hidden), jnp.float32, -s1, s1)
    w2 = jax.random.uniform(k3, (n_hidden, n_class), jnp.float32, -s2, s2)
    b2 = jax.random.uniform(k4, (1, n_class), jnp.float32, -s2, s2)
    return {"w1": w1, "b1": b1, "w2": w2, "b2": b2}


def _reference(feature, adj, params, compute_dtype=jnp.bfloat16):
    """Pure-JAX reference with the same bf16-matmul / f32-accumulate dataflow."""
    w1, b1, w2, b2 = params["w1"], params["b1"], params["w2"], params["b2"]
    cdt = compute_dtype
    a = adj.astype(cdt)
    s1 = jnp.dot(feature.astype(cdt), w1.astype(cdt),
                 preferred_element_type=jnp.float32).astype(cdt)
    h = jnp.maximum(jnp.dot(a, s1, preferred_element_type=jnp.float32) + b1, 0.0)
    s2 = jnp.dot(h.astype(cdt), w2.astype(cdt),
                 preferred_element_type=jnp.float32).astype(cdt)
    logits = jnp.dot(a, s2, preferred_element_type=jnp.float32) + b2
    return jax.nn.log_softmax(logits, axis=1)


if __name__ == "__main__":
    # Small synthetic graph: N nodes, n_feature -> n_hidden -> n_class
    N, n_feature, n_hidden, n_class = 64, 32, 32, 8

    key = jax.random.PRNGKey(0)
    k_feat, k_adj, k_params = jax.random.split(key, 3)

    feature = jax.random.normal(k_feat, (N, n_feature), jnp.float32)
    # Symmetric normalized-ish adjacency (dense Laplacian surrogate)
    a = jax.random.uniform(k_adj, (N, N), jnp.float32)
    adj = (a + a.T) / (2.0 * N)

    params = init_params(k_params, n_feature, n_hidden, n_class)
    ref = _reference(feature, adj, params)

    # Path 1: fused single call (adj resident in VMEM, read from HBM once).
    out_fused = jax.block_until_ready(fastgcn_forward(feature, adj, params))
    assert out_fused.shape == (N, n_class)
    assert bool(jnp.all(jnp.isfinite(out_fused)))
    err_f = float(jnp.max(jnp.abs(out_fused - ref)))
    assert jnp.allclose(out_fused, ref, atol=1e-2, rtol=1e-2), \
        f"fused max|err| = {err_f}"

    # Path 2: split two-call version (the streamed / megacore-parallel path).
    out_split = jax.block_until_ready(
        fastgcn_forward(feature, adj, params, force_split=True))
    err_s = float(jnp.max(jnp.abs(out_split - ref)))
    assert jnp.allclose(out_split, ref, atol=1e-2, rtol=1e-2), \
        f"split max|err| = {err_s}"

    print("KERNEL_OK")
</pallas_src>

<mosaic_0001>
module attributes {stable_mosaic.version = 11 : i64} {
  func.func @_fused_kernel(%arg0: i32, %arg1: i32, %arg2: memref<128x128xbf16, #tpu.memory_space<vmem>>, %arg3: memref<128x128xbf16, #tpu.memory_space<vmem>>, %arg4: memref<128x128xbf16, #tpu.memory_space<vmem>>, %arg5: memref<1x128xf32, #tpu.memory_space<vmem>>, %arg6: memref<1x128xf32, #tpu.memory_space<vmem>>, %arg7: memref<128x128xf32, #tpu.memory_space<vmem>>, %arg8: memref<128x128xbf16, #tpu.memory_space<vmem>>) attributes {dimension_semantics = [#tpu.dimension_semantics<arbitrary>, #tpu.dimension_semantics<arbitrary>], iteration_bounds = array<i64: 2, 1>, scalar_prefetch = 0 : i64, scratch_operands = 1 : i64, tpu.core_type = #tpu.core_type<tc>, window_params = [{pipeline_mode = #tpu.pipeline_mode<synchronous>, transform_indices = @transform_0, window_bounds = array<i64: 128, 128>}, {pipeline_mode = #tpu.pipeline_mode<synchronous>, transform_indices = @transform_1, window_bounds = array<i64: 128, 128>}, {pipeline_mode = #tpu.pipeline_mode<synchronous>, transform_indices = @transform_2, window_bounds = array<i64: 128, 128>}, {pipeline_mode = #tpu.pipeline_mode<synchronous>, transform_indices = @transform_3, window_bounds = array<i64: 1, 128>}, {pipeline_mode = #tpu.pipeline_mode<synchronous>, transform_indices = @transform_4, window_bounds = array<i64: 1, 128>}, {transform_indices = @transform_5, window_bounds = array<i64: 128, 128>}]} {
    %c128_i32 = arith.constant 128 : i32
    %0 = arith.muli %arg1, %c128_i32 : i32
    %1 = tpu.assume_multiple %0, 128 : i32
    %c0_i32 = arith.constant 0 : i32
    %2 = arith.cmpi eq, %arg0, %c0_i32 : i32
    %3 = arith.extui %2 : i1 to i32
    %c0_i32_0 = arith.constant 0 : i32
    %4 = arith.cmpi ne, %3, %c0_i32_0 : i32
    scf.if %4 {
      %8 = arith.index_cast %1 : i32 to index
      %c0 = arith.constant 0 : index
      %9 = vector.load %arg2[%8, %c0] : memref<128x128xbf16, #tpu.memory_space<vmem>>, vector<128x128xbf16>
      %c0_2 = arith.constant 0 : index
      %c0_3 = arith.constant 0 : index
      %10 = vector.load %arg3[%c0_2, %c0_3] : memref<128x128xbf16, #tpu.memory_space<vmem>>, vector<128x128xbf16>
      %cst = arith.constant dense<0.000000e+00> : vector<128x128xf32>
      %11 = tpu.matmul %9, %10, %cst {dimension_numbers = #tpu.dot_dimension_numbers<[1], [0], [0], [1], [0, 0, 1, 1], [], []>} : vector<128x128xbf16>, vector<128x128xbf16>, vector<128x128xf32> -> vector<128x128xf32>
      %c0_4 = arith.constant 0 : index
      %c0_5 = arith.constant 0 : index
      %12 = vector.load %arg5[%c0_4, %c0_5] : memref<1x128xf32, #tpu.memory_space<vmem>>, vector<1x128xf32>
      %13 = vector.broadcast %12 : vector<1x128xf32> to vector<128x128xf32>
      %14 = arith.addf %11, %13 : vector<128x128xf32>
      %cst_6 = arith.constant 0.000000e+00 : f32
      %15 = vector.broadcast %cst_6 : f32 to vector<128x128xf32>
      %16 = arith.maximumf %14, %15 : vector<128x128xf32>
      %17 = arith.truncf %16 : vector<128x128xf32> to vector<128x128xbf16>
      %c0_7 = arith.constant 0 : index
      %c0_8 = arith.constant 0 : index
      %18 = vector.load %arg4[%c0_7, %c0_8] : memref<128x128xbf16, #tpu.memory_space<vmem>>, vector<128x128xbf16>
      %cst_9 = arith.constant dense<0.000000e+00> : vector<128x128xf32>
      %19 = tpu.matmul %17, %18, %cst_9 {dimension_numbers = #tpu.dot_dimension_numbers<[1], [0], [0], [1], [0, 0, 1, 1], [], []>} : vector<128x128xbf16>, vector<128x128xbf16>, vector<128x128xf32> -> vector<128x128xf32>
      %20 = arith.truncf %19 : vector<128x128xf32> to vector<128x128xbf16>
      %21 = arith.index_cast %1 : i32 to index
      %c0_10 = arith.constant 0 : index
      %22 = vector.load %arg8[%21, %c0_10] : memref<128x128xbf16, #tpu.memory_space<vmem>>, vector<128x128xbf16>
      tpu.vector_store %arg8[%21, %c0_10], %20 {strides = array<i32>} : memref<128x128xbf16, #tpu.memory_space<vmem>>, vector<128x128xbf16>,
      %cst_11 = arith.constant 0.000000e+00 : f32
      %23 = vector.broadcast %cst_11 : f32 to vector<128x128xf32>
      %c0_12 = arith.constant 0 : index
      %c0_13 = arith.constant 0 : index
      %24 = vector.load %arg7[%c0_12, %c0_13] : memref<128x128xf32, #tpu.memory_space<vmem>>, vector<128x128xf32>
      tpu.vector_store %arg7[%c0_12, %c0_13], %23 {strides = array<i32>} : memref<128x128xf32, #tpu.memory_space<vmem>>, vector<128x128xf32>,
    } else {
    }
    %c1_i32 = arith.constant 1 : i32
    %5 = arith.cmpi eq, %arg0, %c1_i32 : i32
    %6 = arith.extui %5 : i1 to i32
    %c0_i32_1 = arith.constant 0 : i32
    %7 = arith.cmpi ne, %6, %c0_i32_1 : i32
    scf.if %7 {
      %8 = arith.index_cast %1 : i32 to index
      %c0 = arith.constant 0 : index
      %9 = vector.load %arg2[%8, %c0] : memref<128x128xbf16, #tpu.memory_space<vmem>>, vector<128x128xbf16>
      %c0_2 = arith.constant 0 : index
      %c0_3 = arith.constant 0 : index
      %10 = vector.load %arg8[%c0_2, %c0_3] : memref<128x128xbf16, #tpu.memory_space<vmem>>, vector<128x128xbf16>
      %cst = arith.constant dense<0.000000e+00> : vector<128x128xf32>
      %11 = tpu.matmul %9, %10, %cst {dimension_numbers = #tpu.dot_dimension_numbers<[1], [0], [0], [1], [0, 0, 1, 1], [], []>} : vector<128x128xbf16>, vector<128x128xbf16>, vector<128x128xf32> -> vector<128x128xf32>
      %c0_4 = arith.constant 0 : index
      %c0_5 = arith.constant 0 : index
      %12 = vector.load %arg6[%c0_4, %c0_5] : memref<1x128xf32, #tpu.memory_space<vmem>>, vector<1x128xf32>
      %13 = vector.broadcast %12 : vector<1x128xf32> to vector<128x128xf32>
      %14 = arith.addf %11, %13 : vector<128x128xf32>
      %15 = tpu.iota {dimensions = array<i32: 1>} : vector<128x128xi32>
      %c8_i32 = arith.constant 8 : i32
      %16 = vector.broadcast %c8_i32 : i32 to vector<128x128xi32>
      %17 = arith.cmpi slt, %15, %16 : vector<128x128xi32>
      %cst_6 = arith.constant -1.000000e+30 : f32
      %18 = vector.broadcast %cst_6 : f32 to vector<128x128xf32>
      %19 = arith.select %17, %14, %18 : vector<128x128xi1>, vector<128x128xf32>
      %cst_7 = arith.constant dense<0xFF800000> : vector<128xf32>
      %20 = vector.multi_reduction <maximumf>, %19, %cst_7 [1] : vector<128x128xf32> to vector<128xf32>
      %21 = vector.shape_cast %20 : vector<128xf32> to vector<128x1xf32>
      %22 = vector.broadcast %21 : vector<128x1xf32> to vector<128x128xf32>
      %23 = arith.subf %19, %22 : vector<128x128xf32>
      %24 = math.exp %23 : vector<128x128xf32>
      %cst_8 = arith.constant dense<0.000000e+00> : vector<128xf32>
      %25 = vector.multi_reduction <add>, %24, %cst_8 [1] : vector<128x128xf32> to vector<128xf32>
      %26 = vector.shape_cast %25 : vector<128xf32> to vector<128x1xf32>
      %27 = math.log %26 : vector<128x1xf32>
      %28 = vector.broadcast %27 : vector<128x1xf32> to vector<128x128xf32>
      %29 = arith.subf %23, %28 : vector<128x128xf32>
      %c0_9 = arith.constant 0 : index
      %c0_10 = arith.constant 0 : index
      %30 = vector.load %arg7[%c0_9, %c0_10] : memref<128x128xf32, #tpu.memory_space<vmem>>, vector<128x128xf32>
      tpu.vector_store %arg7[%c0_9, %c0_10], %29 {strides = array<i32>} : memref<128x128xf32, #tpu.memory_space<vmem>>, vector<128x128xf32>,
    } else {
    }
    return
  }
  func.func @transform_0(%arg0: i32, %arg1: i32) -> (i32, i32) {
    %c0_i32 = arith.constant 0 : i32
    %c0_i32_0 = arith.constant 0 : i32
    %c0_i32_1 = arith.constant 0 : i32
    return %c0_i32, %c0_i32_0 : i32, i32
  }
  func.func @transform_1(%arg0: i32, %arg1: i32) -> (i32, i32) {
    %c0_i32 = arith.constant 0 : i32
    %c0_i32_0 = arith.constant 0 : i32
    %c0_i32_1 = arith.constant 0 : i32
    return %c0_i32, %c0_i32_0 : i32, i32
  }
  func.func @transform_2(%arg0: i32, %arg1: i32) -> (i32, i32) {
    %c0_i32 = arith.constant 0 : i32
    %c0_i32_0 = arith.constant 0 : i32
    %c0_i32_1 = arith.constant 0 : i32
    return %c0_i32, %c0_i32_0 : i32, i32
  }
  func.func @transform_3(%arg0: i32, %arg1: i32) -> (i32, i32) {
    %c0_i32 = arith.constant 0 : i32
    %c0_i32_0 = arith.constant 0 : i32
    %c0_i32_1 = arith.constant 0 : i32
    return %c0_i32, %c0_i32_0 : i32, i32
  }
  func.func @transform_4(%arg0: i32, %arg1: i32) -> (i32, i32) {
    %c0_i32 = arith.constant 0 : i32
    %c0_i32_0 = arith.constant 0 : i32
    %c0_i32_1 = arith.constant 0 : i32
    return %c0_i32, %c0_i32_0 : i32, i32
  }
  func.func @transform_5(%arg0: i32, %arg1: i32) -> (i32, i32) {
    %c0_i32 = arith.constant 0 : i32
    %c0_i32_0 = arith.constant 0 : i32
    return %arg1, %c0_i32 : i32, i32
  }
}

module attributes {stable_mosaic.version = 11 : i64} {
  func.func @_fused_kernel(%arg0: i32, %arg1: i32, %arg2: memref<128x128xbf16, #tpu.memory_space<vmem>>, %arg3: memref<128x128xbf16, #tpu.memory_space<vmem>>, %arg4: memref<128x128xbf16, #tpu.memory_space<vmem>>, %arg5: memref<1x128xf32, #tpu.memory_space<vmem>>, %arg6: memref<1x128xf32, #tpu.memory_space<vmem>>, %arg7: memref<128x128xf32, #tpu.memory_space<vmem>>, %arg8: memref<128x128xbf16, #tpu.memory_space<vmem>>) attributes {dimension_semantics = [#tpu.dimension_semantics<arbitrary>, #tpu.dimension_semantics<arbitrary>], iteration_bounds = array<i64: 2, 1>, scalar_prefetch = 0 : i64, scratch_operands = 1 : i64, tpu.core_type = #tpu.core_type<tc>, window_params = [{pipeline_mode = #tpu.pipeline_mode<synchronous>, transform_indices = @transform_0, window_bounds = array<i64: 128, 128>}, {pipeline_mode = #tpu.pipeline_mode<synchronous>, transform_indices = @transform_1, window_bounds = array<i64: 128, 128>}, {pipeline_mode = #tpu.pipeline_mode<synchronous>, transform_indices = @transform_2, window_bounds = array<i64: 128, 128>}, {pipeline_mode = #tpu.pipeline_mode<synchronous>, transform_indices = @transform_3, window_bounds = array<i64: 1, 128>}, {pipeline_mode = #tpu.pipeline_mode<synchronous>, transform_indices = @transform_4, window_bounds = array<i64: 1, 128>}, {transform_indices = @transform_5, window_bounds = array<i64: 128, 128>}]} {
    %c128_i32 = arith.constant 128 : i32
    %0 = arith.muli %arg1, %c128_i32 : i32
    %1 = tpu.assume_multiple %0, 128 : i32
    %c0_i32 = arith.constant 0 : i32
    %2 = arith.cmpi eq, %arg0, %c0_i32 : i32
    %3 = arith.extui %2 : i1 to i32
    %c0_i32_0 = arith.constant 0 : i32
    %4 = arith.cmpi ne, %3, %c0_i32_0 : i32
    scf.if %4 {
      %8 = arith.index_cast %1 : i32 to index
      %c0 = arith.constant 0 : index
      %9 = vector.load %arg2[%8, %c0] : memref<128x128xbf16, #tpu.memory_space<vmem>>, vector<128x128xbf16>
      %c0_2 = arith.constant 0 : index
      %c0_3 = arith.constant 0 : index
      %10 = vector.load %arg3[%c0_2, %c0_3] : memref<128x128xbf16, #tpu.memory_space<vmem>>, vector<128x128xbf16>
      %cst = arith.constant dense<0.000000e+00> : vector<128x128xf32>
      %11 = tpu.matmul %9, %10, %cst {dimension_numbers = #tpu.dot_dimension_numbers<[1], [0], [0], [1], [0, 0, 1, 1], [], []>} : vector<128x128xbf16>, vector<128x128xbf16>, vector<128x128xf32> -> vector<128x128xf32>
      %c0_4 = arith.constant 0 : index
      %c0_5 = arith.constant 0 : index
      %12 = vector.load %arg5[%c0_4, %c0_5] : memref<1x128xf32, #tpu.memory_space<vmem>>, vector<1x128xf32>
      %13 = vector.broadcast %12 : vector<1x128xf32> to vector<128x128xf32>
      %14 = arith.addf %11, %13 : vector<128x128xf32>
      %cst_6 = arith.constant 0.000000e+00 : f32
      %15 = vector.broadcast %cst_6 : f32 to vector<128x128xf32>
      %16 = arith.maximumf %14, %15 : vector<128x128xf32>
      %17 = arith.truncf %16 : vector<128x128xf32> to vector<128x128xbf16>
      %c0_7 = arith.constant 0 : index
      %c0_8 = arith.constant 0 : index
      %18 = vector.load %arg4[%c0_7, %c0_8] : memref<128x128xbf16, #tpu.memory_space<vmem>>, vector<128x128xbf16>
      %cst_9 = arith.constant dense<0.000000e+00> : vector<128x128xf32>
      %19 = tpu.matmul %17, %18, %cst_9 {dimension_numbers = #tpu.dot_dimension_numbers<[1], [0], [0], [1], [0, 0, 1, 1], [], []>} : vector<128x128xbf16>, vector<128x128xbf16>, vector<128x128xf32> -> vector<128x128xf32>
      %20 = arith.truncf %19 : vector<128x128xf32> to vector<128x128xbf16>
      %21 = arith.index_cast %1 : i32 to index
      %c0_10 = arith.constant 0 : index
      %22 = vector.load %arg8[%21, %c0_10] : memref<128x128xbf16, #tpu.memory_space<vmem>>, vector<128x128xbf16>
      tpu.vector_store %arg8[%21, %c0_10], %20 {strides = array<i32>} : memref<128x128xbf16, #tpu.memory_space<vmem>>, vector<128x128xbf16>,
      %cst_11 = arith.constant 0.000000e+00 : f32
      %23 = vector.broadcast %cst_11 : f32 to vector<128x128xf32>
      %c0_12 = arith.constant 0 : index
      %c0_13 = arith.constant 0 : index
      %24 = vector.load %arg7[%c0_12, %c0_13] : memref<128x128xf32, #tpu.memory_space<vmem>>, vector<128x128xf32>
      tpu.vector_store %arg7[%c0_12, %c0_13], %23 {strides = array<i32>} : memref<128x128xf32, #tpu.memory_space<vmem>>, vector<128x128xf32>,
    } else {
    }
    %c1_i32 = arith.constant 1 : i32
    %5 = arith.cmpi eq, %arg0, %c1_i32 : i32
    %6 = arith.extui %5 : i1 to i32
    %c0_i32_1 = arith.constant 0 : i32
    %7 = arith.cmpi ne, %6, %c0_i32_1 : i32
    scf.if %7 {
      %8 = arith.index_cast %1 : i32 to index
      %c0 = arith.constant 0 : index
      %9 = vector.load %arg2[%8, %c0] : memref<128x128xbf16, #tpu.memory_space<vmem>>, vector<128x128xbf16>
      %c0_2 = arith.constant 0 : index
      %c0_3 = arith.constant 0 : index
      %10 = vector.load %arg8[%c0_2, %c0_3] : memref<128x128xbf16, #tpu.memory_space<vmem>>, vector<128x128xbf16>
      %cst = arith.constant dense<0.000000e+00> : vector<128x128xf32>
      %11 = tpu.matmul %9, %10, %cst {dimension_numbers = #tpu.dot_dimension_numbers<[1], [0], [0], [1], [0, 0, 1, 1], [], []>} : vector<128x128xbf16>, vector<128x128xbf16>, vector<128x128xf32> -> vector<128x128xf32>
      %c0_4 = arith.constant 0 : index
      %c0_5 = arith.constant 0 : index
      %12 = vector.load %arg6[%c0_4, %c0_5] : memref<1x128xf32, #tpu.memory_space<vmem>>, vector<1x128xf32>
      %13 = vector.broadcast %12 : vector<1x128xf32> to vector<128x128xf32>
      %14 = arith.addf %11, %13 : vector<128x128xf32>
      %15 = tpu.iota {dimensions = array<i32: 1>} : vector<128x128xi32>
      %c8_i32 = arith.constant 8 : i32
      %16 = vector.broadcast %c8_i32 : i32 to vector<128x128xi32>
      %17 = arith.cmpi slt, %15, %16 : vector<128x128xi32>
      %cst_6 = arith.constant -1.000000e+30 : f32
      %18 = vector.broadcast %cst_6 : f32 to vector<128x128xf32>
      %19 = arith.select %17, %14, %18 : vector<128x128xi1>, vector<128x128xf32>
      %cst_7 = arith.constant dense<0xFF800000> : vector<128xf32>
      %20 = vector.multi_reduction <maximumf>, %19, %cst_7 [1] : vector<128x128xf32> to vector<128xf32>
      %21 = vector.shape_cast %20 : vector<128xf32> to vector<128x1xf32>
      %22 = vector.broadcast %21 : vector<128x1xf32> to vector<128x128xf32>
      %23 = arith.subf %19, %22 : vector<128x128xf32>
      %24 = math.exp %23 : vector<128x128xf32>
      %cst_8 = arith.constant dense<0.000000e+00> : vector<128xf32>
      %25 = vector.multi_reduction <add>, %24, %cst_8 [1] : vector<128x128xf32> to vector<128xf32>
      %26 = vector.shape_cast %25 : vector<128xf32> to vector<128x1xf32>
      %27 = math.log %26 : vector<128x1xf32>
      %28 = vector.broadcast %27 : vector<128x1xf32> to vector<128x128xf32>
      %29 = arith.subf %23, %28 : vector<128x128xf32>
      %c0_9 = arith.constant 0 : index
      %c0_10 = arith.constant 0 : index
      %30 = vector.load %arg7[%c0_9, %c0_10] : memref<128x128xf32, #tpu.memory_space<vmem>>, vector<128x128xf32>
      tpu.vector_store %arg7[%c0_9, %c0_10], %29 {strides = array<i32>} : memref<128x128xf32, #tpu.memory_space<vmem>>, vector<128x128xf32>,
    } else {
    }
    return
  }
  func.func @transform_0(%arg0: i32, %arg1: i32) -> (i32, i32) {
    %c0_i32 = arith.constant 0 : i32
    %c0_i32_0 = arith.constant 0 : i32
    %c0_i32_1 = arith.constant 0 : i32
    return %c0_i32, %c0_i32_0 : i32, i32
  }
  func.func @transform_1(%arg0: i32, %arg1: i32) -> (i32, i32) {
    %c0_i32 = arith.constant 0 : i32
    %c0_i32_0 = arith.constant 0 : i32
    %c0_i32_1 = arith.constant 0 : i32
    return %c0_i32, %c0_i32_0 : i32, i32
  }
  func.func @transform_2(%arg0: i32, %arg1: i32) -> (i32, i32) {
    %c0_i32 = arith.constant 0 : i32
    %c0_i32_0 = arith.constant 0 : i32
    %c0_i32_1 = arith.constant 0 : i32
    return %c0_i32, %c0_i32_0 : i32, i32
  }
  func.func @transform_3(%arg0: i32, %arg1: i32) -> (i32, i32) {
    %c0_i32 = arith.constant 0 : i32
    %c0_i32_0 = arith.constant 0 : i32
    %c0_i32_1 = arith.constant 0 : i32
    return %c0_i32, %c0_i32_0 : i32, i32
  }
  func.func @transform_4(%arg0: i32, %arg1: i32) -> (i32, i32) {
    %c0_i32 = arith.constant 0 : i32
    %c0_i32_0 = arith.constant 0 : i32
    %c0_i32_1 = arith.constant 0 : i32
    return %c0_i32, %c0_i32_0 : i32, i32
  }
  func.func @transform_5(%arg0: i32, %arg1: i32) -> (i32, i32) {
    %c0_i32 = arith.constant 0 : i32
    %c0_i32_0 = arith.constant 0 : i32
    return %arg1, %c0_i32 : i32, i32
  }
}

</mosaic_0001>

<llo_original>
// kernel: tpu_custom_call.1
$region0: #{tpu_custom_call.1}
  #allocation0 [shape = 'u32[]', space=smem, size = 0x4, offset = 0x4, fixed_abs, tag = 'smem constant byte address 0x4 - core index']
  #allocation1 [shape = 'u32[144,128]{1,0:T(1,128)}', space=vmem, size = 0x12000, scoped, tag = 'internal scratch']
  #allocation2 [shape = 'bf16[128,128]{1,0:T(16,128)(2,1)}', space=vmem, size = 0x8000, scoped, tag = 'scratch operand']
  %s0 = inlined_call_operand.hbm [shape: bf16[128,128], index: 0, kind: input, shape index: {}]
  %s1 = inlined_call_operand.hbm [shape: bf16[128,128], index: 1, kind: input, shape index: {}]
  %s2 = inlined_call_operand.hbm [shape: bf16[128,128], index: 2, kind: input, shape index: {}]
  %s3 = inlined_call_operand.vmem [shape: f32[1,128], index: 3, kind: input, shape index: {}]
  %s4 = inlined_call_operand.vmem [shape: f32[1,128], index: 4, kind: input, shape index: {}]
  %s5 = inlined_call_operand.hbm [shape: f32[128,128], index: 5, kind: output, shape index: {}]
  %s6 = sld [smem:[#allocation0]]
  $region73: #{tpu_custom_call.1} parent=0
    _
  %s8 = ssub.s32 1, %s6
  %s9 = scalar_select 0, %s8, %s6
  $region1: #{tpu_custom_call.1} parent=0
    #allocation3 [shape = 'u8[32768]{0}', space=vmem, size = 0x8000, scoped, tag = 'input window, operand 0, single buffered']
    #allocation4 [shape = 's32[2]{0}', space=sflag, size = 0x8, scoped, tag = 'scoped memory for tpu_custom_call.1']
    #allocation5 [shape = 's32[2]{0}', space=sflag, size = 0x8, scoped, tag = 'scoped memory for tpu_custom_call.1']
    #allocation6 [shape = 'u8[32768]{0}', space=vmem, size = 0x8000, scoped, tag = 'input window, operand 1, single buffered']
    #allocation7 [shape = 's32[1]{0}', space=sflag, size = 0x4, scoped, tag = 'scoped memory for tpu_custom_call.1']
    #allocation8 [shape = 'u8[32768]{0}', space=vmem, size = 0x8000, scoped, tag = 'input window, operand 2, single buffered']
    #allocation9 [shape = 'u8[65536]{0}', space=vmem, size = 0x10000, scoped, tag = 'output window, operand 0, single buffered']
    %10 = vsyncpa [#allocation4], 0
    %11 = vsyncpa [#allocation7], 0
    %12 = vsyncpa [#allocation5], 0
    loop: start=0, step=1, limit=4
    $region2: #{tpu_custom_call.1} parent=1 // loop_pre_header
      _
    $region3: #{tpu_custom_call.1} parent=1 // loop_header
      %s14 = sphi 0, %s18
      %p15 = scmp.ge.s32.totalorder %s14, 4
      %s21 = sphi 0, %s33
      %s22 = sphi 0, %s29
      %s23 = sphi 0, %s21
      %s24 = sphi 0, %s22
      %s25 = sphi 0, %s23
      %s26 = sphi 0, %s24
      %s34 = sphi 0, %s34
      %s36 = sphi 0, %s34
      %s37 = sphi 0, %s36
      %s51 = sphi 0, %s37
      %s55 = sphi 0, %s55
      %s57 = sphi 0, %s55
      %s58 = sphi 0, %s57
      %s72 = sphi 0, %s58
      %s76 = sphi 0, %s76
      %s78 = sphi 0, %s76
      %s79 = sphi 0, %s78
      %s93 = sphi 0, %s79
      %s97 = sphi 0, %s97
      %s99 = sphi 0, %s97
      %s100 = sphi 0, %s99
      %s114 = sphi 0, %s100
      %s118 = sphi 0, %s118
      %s120 = sphi 0, %s118
      %s121 = sphi 0, %s120
      %s135 = sphi 0, %s121
      %s141 = sphi 0, %s143
      %s144 = sphi 0, %s141
      %s145 = sphi 0, %s144
      %s161 = sphi 0, %s145
    $region4: #{tpu_custom_call.1} parent=1 // loop_header_branch
      %17 = sbr.rel (%p15) target = $region8
    $region5: #{tpu_custom_call.1} parent=1 // loop_body
      %s19 = ssub.s32 %s14, 1
      %s20 = ssub.s32 %s14, 2
      %s27 = sadd.s32 1, %s22
      %p28 = scmp.ge.s32.totalorder %s27, 1
      %s29 = scalar_select %p28, 0, %s27
      %s30 = sadd.s32 1, %s21
      %s31 = scalar_select %p28, %s30, %s21
      %p32 = scmp.ge.s32.totalorder %s31, 2
      %s33 = scalar_select %p32, 0, %s31
      %s35 = sadd.s32 %s34, 1
      %p38 = scmp.eq.s32.totalorder %s14, 1
      %p39 = scmp.ne.s32.totalorder %s34, %s36
      %p40 = scmp.eq.s32.totalorder %s14, 0
      %p41 = por %p39, %p40
      %p42 = scmp.ne.s32.totalorder %s34, %s36
      %p43 = scmp.eq.s32.totalorder %s19, 1
      %p44 = por %p42, %p43
      %p45 = scmp.ne.s32.totalorder %s36, %s37
      %p46 = scmp.eq.s32.totalorder %s19, 0
      %p47 = por %p45, %p46
      %p48 = scmp.ne.s32.totalorder %s36, %s37
      %p49 = scmp.eq.s32.totalorder %s20, 1
      %p50 = por %p48, %p49
      %p52 = scmp.ne.s32.totalorder %s37, %s51
      %p53 = scmp.eq.s32.totalorder %s20, 0
      %p54 = por %p52, %p53
      %s56 = sadd.s32 %s55, 1
      %p59 = scmp.eq.s32.totalorder %s14, 1
      %p60 = scmp.ne.s32.totalorder %s55, %s57
      %p61 = scmp.eq.s32.totalorder %s14, 0
      %p62 = por %p60, %p61
      %p63 = scmp.ne.s32.totalorder %s55, %s57
      %p64 = scmp.eq.s32.totalorder %s19, 1
      %p65 = por %p63, %p64
      %p66 = scmp.ne.s32.totalorder %s57, %s58
      %p67 = scmp.eq.s32.totalorder %s19, 0
      %p68 = por %p66, %p67
      %p69 = scmp.ne.s32.totalorder %s57, %s58
      %p70 = scmp.eq.s32.totalorder %s20, 1
      %p71 = por %p69, %p70
      %p73 = scmp.ne.s32.totalorder %s58, %s72
      %p74 = scmp.eq.s32.totalorder %s20, 0
      %p75 = por %p73, %p74
      %s77 = sadd.s32 %s76, 1
      %p80 = scmp.eq.s32.totalorder %s14, 1
      %p81 = scmp.ne.s32.totalorder %s76, %s78
      %p82 = scmp.eq.s32.totalorder %s14, 0
      %p83 = por %p81, %p82
      %p84 = scmp.ne.s32.totalorder %s76, %s78
      %p85 = scmp.eq.s32.totalorder %s19, 1
      %p86 = por %p84, %p85
      %p87 = scmp.ne.s32.totalorder %s78, %s79
      %p88 = scmp.eq.s32.totalorder %s19, 0
      %p89 = por %p87, %p88
      %p90 = scmp.ne.s32.totalorder %s78, %s79
      %p91 = scmp.eq.s32.totalorder %s20, 1
      %p92 = por %p90, %p91
      %p94 = scmp.ne.s32.totalorder %s79, %s93
      %p95 = scmp.eq.s32.totalorder %s20, 0
      %p96 = por %p94, %p95
      %s98 = sadd.s32 %s97, 1
      %p101 = scmp.eq.s32.totalorder %s14, 1
      %p102 = scmp.ne.s32.totalorder %s97, %s99
      %p103 = scmp.eq.s32.totalorder %s14, 0
      %p104 = por %p102, %p103
      %p105 = scmp.ne.s32.totalorder %s97, %s99
      %p106 = scmp.eq.s32.totalorder %s19, 1
      %p107 = por %p105, %p106
      %p108 = scmp.ne.s32.totalorder %s99, %s100
      %p109 = scmp.eq.s32.totalorder %s19, 0
      %p110 = por %p108, %p109
      %p111 = scmp.ne.s32.totalorder %s99, %s100
      %p112 = scmp.eq.s32.totalorder %s20, 1
      %p113 = por %p111, %p112
      %p115 = scmp.ne.s32.totalorder %s100, %s114
      %p116 = scmp.eq.s32.totalorder %s20, 0
      %p117 = por %p115, %p116
      %s119 = sadd.s32 %s118, 1
      %p122 = scmp.eq.s32.totalorder %s14, 1
      %p123 = scmp.ne.s32.totalorder %s118, %s120
      %p124 = scmp.eq.s32.totalorder %s14, 0
      %p125 = por %p123, %p124
      %p126 = scmp.ne.s32.totalorder %s118, %s120
      %p127 = scmp.eq.s32.totalorder %s19, 1
      %p128 = por %p126, %p127
      %p129 = scmp.ne.s32.totalorder %s120, %s121
      %p130 = scmp.eq.s32.totalorder %s19, 0
      %p131 = por %p129, %p130
      %p132 = scmp.ne.s32.totalorder %s120, %s121
      %p133 = scmp.eq.s32.totalorder %s20, 1
      %p134 = por %p132, %p133
      %p136 = scmp.ne.s32.totalorder %s121, %s135
      %p137 = scmp.eq.s32.totalorder %s20, 0
      %p138 = por %p136, %p137
      %s139 = ssub.s32 %s22, %s29
      %p140 = scmp.eq.s32.totalorder %s139, 0
      %s142 = sadd.s32 %s141, 1
      %s143 = scalar_select %p140, %s141, %s142
      %p146 = pneg %p140
      %p147 = scmp.eq.s32.totalorder %s14, 1
      %p148 = por %p146, %p147
      %p149 = scmp.ne.s32.totalorder %s141, %s144
      %p150 = scmp.eq.s32.totalorder %s14, 0
      %p151 = por %p149, %p150
      %p152 = scmp.ne.s32.totalorder %s141, %s144
      %p153 = scmp.eq.s32.totalorder %s19, 1
      %p154 = por %p152, %p153
      %p155 = scmp.ne.s32.totalorder %s144, %s145
      %p156 = scmp.eq.s32.totalorder %s19, 0
      %p157 = por %p155, %p156
      %p158 = scmp.ne.s32.totalorder %s144, %s145
      %p159 = scmp.eq.s32.totalorder %s20, 1
      %p160 = por %p158, %p159
      %p162 = scmp.ne.s32.totalorder %s145, %s161
      %p163 = scmp.eq.s32.totalorder %s20, 0
      %p164 = por %p162, %p163
      %p165 = scmp.le.s32.totalorder 1, %s14
      %p166 = scmp.lt.s32.totalorder %s14, 3
      %p167 = pnand %p165, %p166
      %p168 = pneg %p167
      // Predicated region
      $region9: #{tpu_custom_call.1} parent=5 // pred_check
        _
      $region10: #{tpu_custom_call.1} parent=5 // pred_check_branch
        %170 = sbr.rel (%p167) target = $region12
      $region11: #{tpu_custom_call.1} parent=5 // pred_region
        %s171 = ssub.s32 %s14, 1
        // Predicated region
        $region13: #{tpu_custom_call.1} parent=11 // pred_check
          %p172 = pneg %p47
        $region14: #{tpu_custom_call.1} parent=11 // pred_check_branch
          %174 = sbr.rel (%p172) target = $region16
        $region15: #{tpu_custom_call.1} parent=11 // pred_region
          %s176 = ssub.s32 1024, 1024
          %177 = vsyncadd [#allocation4], %s176
          %s178 = sshll.u32 [#allocation3], 4
          %s179 = int_to_ptr.vmem [resolvable:$true] %s178
          %184 = dma.hbm_to_vmem [thread:$0]  %s0, 1024, %s179, [#allocation4], 64, 64, 4
        $region16: #{tpu_custom_call.1} parent=11 // pred_fallthru
          _
        // Predicated region
        $region17: #{tpu_custom_call.1} parent=11 // pred_check
          %p185 = pneg %p68
        $region18: #{tpu_custom_call.1} parent=11 // pred_check_branch
          %187 = sbr.rel (%p185) target = $region20
        $region19: #{tpu_custom_call.1} parent=11 // pred_region
          %s189 = ssub.s32 1024, 1024
          %190 = vsyncadd [#allocation7], %s189
          %s191 = sshll.u32 [#allocation6], 4
          %s192 = int_to_ptr.vmem [resolvable:$true] %s191
          %197 = dma.hbm_to_vmem [thread:$0]  %s1, 1024, %s192, [#allocation7], 64, 64, 4
        $region20: #{tpu_custom_call.1} parent=11 // pred_fallthru
          _
        // Predicated region
        $region21: #{tpu_custom_call.1} parent=11 // pred_check
          %p198 = pneg %p89
        $region22: #{tpu_custom_call.1} parent=11 // pred_check_branch
          %200 = sbr.rel (%p198) target = $region24
        $region23: #{tpu_custom_call.1} parent=11 // pred_region
          %s202 = ssub.s32 1024, 1024
          %203 = vsyncadd [#allocation7], %s202
          %s204 = sshll.u32 [#allocation8], 4
          %s205 = int_to_ptr.vmem [resolvable:$true] %s204
          %210 = dma.hbm_to_vmem [thread:$0]  %s2, 1024, %s205, [#allocation7], 64, 64, 4
        $region24: #{tpu_custom_call.1} parent=11 // pred_fallthru
          _
        // Predicated region
        $region25: #{tpu_custom_call.1} parent=11 // pred_check
          %p211 = pneg %p110
        $region26: #{tpu_custom_call.1} parent=11 // pred_check_branch
          %213 = sbr.rel (%p211) target = $region28
        $region27: #{tpu_custom_call.1} parent=11 // pred_region
          _
        $region28: #{tpu_custom_call.1} parent=11 // pred_fallthru
          _
        // Predicated region
        $region29: #{tpu_custom_call.1} parent=11 // pred_check
          %p214 = pneg %p131
        $region30: #{tpu_custom_call.1} parent=11 // pred_check_branch
          %216 = sbr.rel (%p214) target = $region32
        $region31: #{tpu_custom_call.1} parent=11 // pred_region
          _
        $region32: #{tpu_custom_call.1} parent=11 // pred_fallthru
          _
      $region12: #{tpu_custom_call.1} parent=5 // pred_fallthru
        _
      %p217 = scmp.lt.s32.totalorder %s14, 2
      // Predicated region
      $region33: #{tpu_custom_call.1} parent=5 // pred_check
        %p218 = pneg %p217
      $region34: #{tpu_custom_call.1} parent=5 // pred_check_branch
        %220 = sbr.rel (%p218) target = $region36
      $region35: #{tpu_custom_call.1} parent=5 // pred_region
        _
      $region36: #{tpu_custom_call.1} parent=5 // pred_fallthru
        _
      %p221 = scmp.le.s32.totalorder 1, %s14
      %p222 = scmp.lt.s32.totalorder %s14, 3
      %p223 = pnand %p221, %p222
      %p224 = pneg %p223
      // Predicated region
      $region37: #{tpu_custom_call.1} parent=5 // pred_check
        _
      $region38: #{tpu_custom_call.1} parent=5 // pred_check_branch
        %226 = sbr.rel (%p223) target = $region40
      $region39: #{tpu_custom_call.1} parent=5 // pred_region
        %s227 = ssub.s32 %s14, 1
        // Predicated region
        $region41: #{tpu_custom_call.1} parent=39 // pred_check
          %p228 = pneg %p47
        $region42: #{tpu_custom_call.1} parent=39 // pred_check_branch
          %230 = sbr.rel (%p228) target = $region44
        $region43: #{tpu_custom_call.1} parent=39 // pred_region
          %231 = dma.done [#allocation4], 1024
        $region44: #{tpu_custom_call.1} parent=39 // pred_fallthru
          _
        // Predicated region
        $region45: #{tpu_custom_call.1} parent=39 // pred_check
          %p232 = pneg %p68
        $region46: #{tpu_custom_call.1} parent=39 // pred_check_branch
          %234 = sbr.rel (%p232) target = $region48
        $region47: #{tpu_custom_call.1} parent=39 // pred_region
          %235 = dma.done [#allocation7], 1024
        $region48: #{tpu_custom_call.1} parent=39 // pred_fallthru
          _
        // Predicated region
        $region49: #{tpu_custom_call.1} parent=39 // pred_check
          %p236 = pneg %p89
        $region50: #{tpu_custom_call.1} parent=39 // pred_check_branch
          %238 = sbr.rel (%p236) target = $region52
        $region51: #{tpu_custom_call.1} parent=39 // pred_region
          %239 = dma.done [#allocation7], 1024
        $region52: #{tpu_custom_call.1} parent=39 // pred_fallthru
          _
        %p240 = pneg %p47
        %p241 = pneg %p44
        %p242 = pneg %p68
        %p243 = pneg %p65
        %p244 = pneg %p89
        %p245 = pneg %p86
        %p246 = pneg %p110
        %p247 = pneg %p107
        %p248 = pneg %p131
        %p249 = pneg %p128
        %p250 = pneg %p157
        %p251 = pneg %p154
        %s252 = smul.u32 16, %s24
        %s254 = smul.u32 %s24, 128
        %p255 = scmp.eq.s32.totalorder %s23, 0
        // Predicated region
        $region53: #{tpu_custom_call.1} parent=39 // pred_check
          %p256 = pneg %p255
        $region54: #{tpu_custom_call.1} parent=39 // pred_check_branch
          %258 = sbr.rel (%p256) target = $region56
        $region55: #{tpu_custom_call.1} parent=39 // pred_region
          %s259 = sshra.s32 %s254, 3
          %s260 = sand.u32 %s254, 7
          %s261 = smul.addr %s259, 4
          %s262 = scalar_lea.vmem [#allocation3], %s261
          %v263 = vld [vmem:[%s262] sm:$0xf]
          %v264 = vld [vmem:[%s262 + $0x4] sm:$0xf]
          %v265 = vld [vmem:[%s262 + $0x8] sm:$0xf]
          %v266 = vld [vmem:[%s262 + $0xc] sm:$0xf]
          %v267 = vld [vmem:[%s262 + $0x10] sm:$0xf]
          %v268 = vld [vmem:[%s262 + $0x14] sm:$0xf]
          %v269 = vld [vmem:[%s262 + $0x18] sm:$0xf]
          %v270 = vld [vmem:[%s262 + $0x1c] sm:$0xf]
          %v271 = vld [vmem:[%s262 + $0x20] sm:$0xf]
          %v272 = vld [vmem:[%s262 + $0x24] sm:$0xf]
          %v273 = vld [vmem:[%s262 + $0x28] sm:$0xf]
          %v274 = vld [vmem:[%s262 + $0x2c] sm:$0xf]
          %v275 = vld [vmem:[%s262 + $0x30] sm:$0xf]
          %v276 = vld [vmem:[%s262 + $0x34] sm:$0xf]
          %v277 = vld [vmem:[%s262 + $0x38] sm:$0xf]
          %v278 = vld [vmem:[%s262 + $0x3c] sm:$0xf]
          %v279 = vld [vmem:[#allocation6] sm:$0xf]
          %v280 = vld [vmem:[#allocation6 + $0x4] sm:$0xf]
          %v281 = vld [vmem:[#allocation6 + $0x8] sm:$0xf]
          %v282 = vld [vmem:[#allocation6 + $0xc] sm:$0xf]
          %v283 = vld [vmem:[#allocation6 + $0x10] sm:$0xf]
          %v284 = vld [vmem:[#allocation6 + $0x14] sm:$0xf]
          %v285 = vld [vmem:[#allocation6 + $0x18] sm:$0xf]
          %v286 = vld [vmem:[#allocation6 + $0x1c] sm:$0xf]
          %v287 = vld [vmem:[#allocation6 + $0x20] sm:$0xf]
          %v288 = vld [vmem:[#allocation6 + $0x24] sm:$0xf]
          %v289 = vld [vmem:[#allocation6 + $0x28] sm:$0xf]
          %v290 = vld [vmem:[#allocation6 + $0x2c] sm:$0xf]
          %v291 = vld [vmem:[#allocation6 + $0x30] sm:$0xf]
          %v292 = vld [vmem:[#allocation6 + $0x34] sm:$0xf]
          %v293 = vld [vmem:[#allocation6 + $0x38] sm:$0xf]
          %v294 = vld [vmem:[#allocation6 + $0x3c] sm:$0xf]
          %v295 = vld [vmem:[%s3] sm:$0x1]
          %v297 = vlaneseq
          %v298 = vshrl.u32 %v297, 7
          %v299 = vsub.s32 0, %v298
          %v300 = vrot.slane %v295, %v299
          %v318 = vunpack.c.l.b16 %v263
          %v319 = vunpack.c.l.b16 %v264
          %v320 = vunpack.c.l.b16 %v265
          %v321 = vunpack.c.l.b16 %v266
          %v322 = vunpack.c.l.b16 %v267
          %v323 = vunpack.c.l.b16 %v268
          %v324 = vunpack.c.l.b16 %v269
          %v325 = vunpack.c.l.b16 %v270
          %v326 = vunpack.c.l.b16 %v271
          %v327 = vunpack.c.l.b16 %v272
          %v328 = vunpack.c.l.b16 %v273
          %v329 = vunpack.c.l.b16 %v274
          %v330 = vunpack.c.l.b16 %v275
          %v331 = vunpack.c.l.b16 %v276
          %v332 = vunpack.c.l.b16 %v277
          %v333 = vunpack.c.l.b16 %v278
          %v334 = vpack.c.b16 %v319, %v318
          %v335 = vpack.c.b16 %v321, %v320
          %v336 = vpack.c.b16 %v323, %v322
          %v337 = vpack.c.b16 %v325, %v324
          %v338 = vpack.c.b16 %v327, %v326
          %v339 = vpack.c.b16 %v329, %v328
          %v340 = vpack.c.b16 %v331, %v330
          %v341 = vpack.c.b16 %v333, %v332
          %v366 = vunpack.c.l.b16 %v279
          %v367 = vunpack.c.l.b16 %v280
          %v368 = vunpack.c.l.b16 %v281
          %v369 = vunpack.c.l.b16 %v282
          %v370 = vunpack.c.l.b16 %v283
          %v371 = vunpack.c.l.b16 %v284
          %v372 = vunpack.c.l.b16 %v285
          %v373 = vunpack.c.l.b16 %v286
          %v374 = vunpack.c.l.b16 %v287
          %v375 = vunpack.c.l.b16 %v288
          %v376 = vunpack.c.l.b16 %v289
          %v377 = vunpack.c.l.b16 %v290
          %v378 = vunpack.c.l.b16 %v291
          %v379 = vunpack.c.l.b16 %v292
          %v380 = vunpack.c.l.b16 %v293
          %v381 = vunpack.c.l.b16 %v294
          %v382 = vpack.c.b16 %v367, %v366
          %v383 = vpack.c.b16 %v369, %v368
          %v384 = vpack.c.b16 %v371, %v370
          %v385 = vpack.c.b16 %v373, %v372
          %v386 = vpack.c.b16 %v375, %v374
          %v387 = vpack.c.b16 %v377, %v376
          %v388 = vpack.c.b16 %v379, %v378
          %v389 = vpack.c.b16 %v381, %v380
          %398 = vmatprep.subr.bf16.mxu0 0
          %399 = vmatpush1.bf16.msra.mxu0 %v382
          %400 = vmatprep.subr.bf16.mxu0 0
          %401 = vmatpush1.bf16.msra.mxu0 %v383
          %402 = vmatprep.subr.bf16.mxu0 0
          %403 = vmatpush1.bf16.msra.mxu0 %v384
          %404 = vmatprep.subr.bf16.mxu0 0
          %405 = vmatpush1.bf16.msra.mxu0 %v385
          %406 = vmatprep.subr.bf16.mxu0 0
          %407 = vmatpush1.bf16.msra.mxu0 %v386
          %408 = vmatprep.subr.bf16.mxu0 0
          %409 = vmatpush1.bf16.msra.mxu0 %v387
          %410 = vmatprep.subr.bf16.mxu0 0
          %411 = vmatpush1.bf16.msra.mxu0 %v388
          %412 = vmatprep.subr.bf16.mxu0 0
          %413 = vmatpush1.bf16.msra.mxu0 %v389
          %414 = vmatprep.subr.bf16.mxu0 0
          %415 = vmatpush1.bf16.msra.mxu0 0
          %416 = vmatprep.subr.bf16.mxu0 0
          %417 = vmatpush1.bf16.msra.mxu0 0
          %418 = vmatprep.subr.bf16.mxu0 0
          %419 = vmatpush1.bf16.msra.mxu0 0
          %420 = vmatprep.subr.bf16.mxu0 0
          %421 = vmatpush1.bf16.msra.mxu0 0
          %422 = vmatprep.subr.bf16.mxu0 0
          %423 = vmatpush1.bf16.msra.mxu0 0
          %424 = vmatprep.subr.bf16.mxu0 0
          %425 = vmatpush1.bf16.msra.mxu0 0
          %426 = vmatprep.subr.bf16.mxu0 0
          %427 = vmatpush1.bf16.msra.mxu0 0
          %428 = vmatprep.subr.bf16.mxu0 0
          %429 = vmatpush1.bf16.msra.mxu0 0
          %430 = vmatprep.mubr.bf16.mxu0 0
          %431 = vmatmul.mubr.bf16.gmra.mrb[0].mxu0 %v334
          %v432 = vpop.f32.mrb[0].mxu0
          %v433 = vadd.f32 %v300, %v432
          %v434 = vpop.f32.mrb[0].mxu0
          %v435 = vpop.f32.mrb[0].mxu0
          %v436 = vadd.f32 %v300, %v435
          %v437 = vpop.f32.mrb[0].mxu0
          %438 = vmatprep.mubr.bf16.mxu0 0
          %439 = vmatmul.mubr.bf16.gmra.mrb[0].mxu0 %v335
          %v440 = vpop.f32.mrb[0].mxu0
          %v441 = vadd.f32 %v300, %v440
          %v442 = vpop.f32.mrb[0].mxu0
          %v443 = vpop.f32.mrb[0].mxu0
          %v444 = vadd.f32 %v300, %v443
          %v445 = vpop.f32.mrb[0].mxu0
          %446 = vmatprep.mubr.bf16.mxu0 0
          %447 = vmatmul.mubr.bf16.gmra.mrb[0].mxu0 %v336
          %v448 = vpop.f32.mrb[0].mxu0
          %v449 = vadd.f32 %v300, %v448
          %v450 = vpop.f32.mrb[0].mxu0
          %v451 = vpop.f32.mrb[0].mxu0
          %v452 = vadd.f32 %v300, %v451
          %v453 = vpop.f32.mrb[0].mxu0
          %454 = vmatprep.mubr.bf16.mxu0 0
          %455 = vmatmul.mubr.bf16.gmra.mrb[0].mxu0 %v337
          %v456 = vpop.f32.mrb[0].mxu0
          %v457 = vadd.f32 %v300, %v456
          %v458 = vpop.f32.mrb[0].mxu0
          %v459 = vpop.f32.mrb[0].mxu0
          %v460 = vadd.f32 %v300, %v459
          %v461 = vpop.f32.mrb[0].mxu0
          %462 = vmatprep.mubr.bf16.mxu0 0
          %463 = vmatmul.mubr.bf16.gmra.mrb[0].mxu0 %v338
          %v464 = vpop.f32.mrb[0].mxu0
          %v465 = vadd.f32 %v300, %v464
          %v466 = vpop.f32.mrb[0].mxu0
          %v467 = vpop.f32.mrb[0].mxu0
          %v468 = vadd.f32 %v300, %v467
          %v469 = vpop.f32.mrb[0].mxu0
          %470 = vmatprep.mubr.bf16.mxu0 0
          %471 = vmatmul.mubr.bf16.gmra.mrb[0].mxu0 %v339
          %v472 = vpop.f32.mrb[0].mxu0
          %v473 = vadd.f32 %v300, %v472
          %v474 = vpop.f32.mrb[0].mxu0
          %v475 = vpop.f32.mrb[0].mxu0
          %v476 = vadd.f32 %v300, %v475
          %v477 = vpop.f32.mrb[0].mxu0
          %478 = vmatprep.mubr.bf16.mxu0 0
          %479 = vmatmul.mubr.bf16.gmra.mrb[0].mxu0 %v340
          %v480 = vpop.f32.mrb[0].mxu0
          %v481 = vadd.f32 %v300, %v480
          %v482 = vpop.f32.mrb[0].mxu0
          %v483 = vpop.f32.mrb[0].mxu0
          %v484 = vadd.f32 %v300, %v483
          %v485 = vpop.f32.mrb[0].mxu0
          %486 = vmatprep.mubr.bf16.mxu0 0
          %487 = vmatmul.mubr.bf16.gmra.mrb[0].mxu0 %v341
          %v488 = vpop.f32.mrb[0].mxu0
          %v489 = vadd.f32 %v300, %v488
          %v490 = vpop.f32.mrb[0].mxu0
          %v491 = vpop.f32.mrb[0].mxu0
          %v492 = vadd.f32 %v300, %v491
          %v493 = vpop.f32.mrb[0].mxu0
          %494 = vdwg.mxu0
          %v495 = vmax.f32 %v433, 0.0
          %v496 = vmax.f32 %v436, 0.0
          %v497 = vmax.f32 %v441, 0.0
          %v498 = vmax.f32 %v444, 0.0
          %v499 = vmax.f32 %v449, 0.0
          %v500 = vmax.f32 %v452, 0.0
          %v501 = vmax.f32 %v457, 0.0
          %v502 = vmax.f32 %v460, 0.0
          %v503 = vmax.f32 %v465, 0.0
          %v504 = vmax.f32 %v468, 0.0
          %v505 = vmax.f32 %v473, 0.0
          %v506 = vmax.f32 %v476, 0.0
          %v507 = vmax.f32 %v481, 0.0
          %v508 = vmax.f32 %v484, 0.0
          %v509 = vmax.f32 %v489, 0.0
          %v510 = vmax.f32 %v492, 0.0
          %v511 = vpack.c.bf16 %v496, %v495
          %v512 = vpack.c.bf16 %v498, %v497
          %v513 = vpack.c.bf16 %v500, %v499
          %v514 = vpack.c.bf16 %v502, %v501
          %v515 = vpack.c.bf16 %v504, %v503
          %v516 = vpack.c.bf16 %v506, %v505
          %v517 = vpack.c.bf16 %v508, %v507
          %v518 = vpack.c.bf16 %v510, %v509
          %v519 = vld [vmem:[#allocation8] sm:$0xf]
          %v520 = vld [vmem:[#allocation8 + $0x4] sm:$0xf]
          %v521 = vld [vmem:[#allocation8 + $0x8] sm:$0xf]
          %v522 = vld [vmem:[#allocation8 + $0xc] sm:$0xf]
          %v523 = vld [vmem:[#allocation8 + $0x10] sm:$0xf]
          %v524 = vld [vmem:[#allocation8 + $0x14] sm:$0xf]
          %v525 = vld [vmem:[#allocation8 + $0x18] sm:$0xf]
          %v526 = vld [vmem:[#allocation8 + $0x1c] sm:$0xf]
          %v527 = vld [vmem:[#allocation8 + $0x20] sm:$0xf]
          %v528 = vld [vmem:[#allocation8 + $0x24] sm:$0xf]
          %v529 = vld [vmem:[#allocation8 + $0x28] sm:$0xf]
          %v530 = vld [vmem:[#allocation8 + $0x2c] sm:$0xf]
          %v531 = vld [vmem:[#allocation8 + $0x30] sm:$0xf]
          %v532 = vld [vmem:[#allocation8 + $0x34] sm:$0xf]
          %v533 = vld [vmem:[#allocation8 + $0x38] sm:$0xf]
          %v534 = vld [vmem:[#allocation8 + $0x3c] sm:$0xf]
          %v551 = vunpack.c.l.b16 %v519
          %v552 = vunpack.c.l.b16 %v520
          %v553 = vunpack.c.l.b16 %v521
          %v554 = vunpack.c.l.b16 %v522
          %v555 = vunpack.c.l.b16 %v523
          %v556 = vunpack.c.l.b16 %v524
          %v557 = vunpack.c.l.b16 %v525
          %v558 = vunpack.c.l.b16 %v526
          %v559 = vunpack.c.l.b16 %v527
          %v560 = vunpack.c.l.b16 %v528
          %v561 = vunpack.c.l.b16 %v529
          %v562 = vunpack.c.l.b16 %v530
          %v563 = vunpack.c.l.b16 %v531
          %v564 = vunpack.c.l.b16 %v532
          %v565 = vunpack.c.l.b16 %v533
          %v566 = vunpack.c.l.b16 %v534
          %v567 = vpack.c.b16 %v552, %v551
          %v568 = vpack.c.b16 %v554, %v553
          %v569 = vpack.c.b16 %v556, %v555
          %v570 = vpack.c.b16 %v558, %v557
          %v571 = vpack.c.b16 %v560, %v559
          %v572 = vpack.c.b16 %v562, %v561
          %v573 = vpack.c.b16 %v564, %v563
          %v574 = vpack.c.b16 %v566, %v565
          %583 = vmatprep.subr.bf16.mxu0 0
          %584 = vmatpush1.bf16.msra.mxu0 %v567
          %585 = vmatprep.subr.bf16.mxu0 0
          %586 = vmatpush1.bf16.msra.mxu0 %v568
          %587 = vmatprep.subr.bf16.mxu0 0
          %588 = vmatpush1.bf16.msra.mxu0 %v569
          %589 = vmatprep.subr.bf16.mxu0 0
          %590 = vmatpush1.bf16.msra.mxu0 %v570
          %591 = vmatprep.subr.bf16.mxu0 0
          %592 = vmatpush1.bf16.msra.mxu0 %v571
          %593 = vmatprep.subr.bf16.mxu0 0
          %594 = vmatpush1.bf16.msra.mxu0 %v572
          %595 = vmatprep.subr.bf16.mxu0 0
          %596 = vmatpush1.bf16.msra.mxu0 %v573
          %597 = vmatprep.subr.bf16.mxu0 0
          %598 = vmatpush1.bf16.msra.mxu0 %v574
          %599 = vmatprep.subr.bf16.mxu0 0
          %600 = vmatpush1.bf16.msra.mxu0 0
          %601 = vmatprep.subr.bf16.mxu0 0
          %602 = vmatpush1.bf16.msra.mxu0 0
          %603 = vmatprep.subr.bf16.mxu0 0
          %604 = vmatpush1.bf16.msra.mxu0 0
          %605 = vmatprep.subr.bf16.mxu0 0
          %606 = vmatpush1.bf16.msra.mxu0 0
          %607 = vmatprep.subr.bf16.mxu0 0
          %608 = vmatpush1.bf16.msra.mxu0 0
          %609 = vmatprep.subr.bf16.mxu0 0
          %610 = vmatpush1.bf16.msra.mxu0 0
          %611 = vmatprep.subr.bf16.mxu0 0
          %612 = vmatpush1.bf16.msra.mxu0 0
          %613 = vmatprep.subr.bf16.mxu0 0
          %614 = vmatpush1.bf16.msra.mxu0 0
          %615 = vmatprep.mubr.bf16.mxu0 0
          %616 = vmatmul.mubr.bf16.gmra.mrb[0].mxu0 %v511
          %v617 = vpop.f32.mrb[0].mxu0
          %v618 = vadd.f32 0.0, %v617
          %v619 = vpop.f32.mrb[0].mxu0
          %v620 = vpop.f32.mrb[0].mxu0
          %v621 = vadd.f32 0.0, %v620
          %v622 = vpop.f32.mrb[0].mxu0
          %623 = vmatprep.mubr.bf16.mxu0 0
          %624 = vmatmul.mubr.bf16.gmra.mrb[0].mxu0 %v512
          %v625 = vpop.f32.mrb[0].mxu0
          %v626 = vadd.f32 0.0, %v625
          %v627 = vpop.f32.mrb[0].mxu0
          %v628 = vpop.f32.mrb[0].mxu0
          %v629 = vadd.f32 0.0, %v628
          %v630 = vpop.f32.mrb[0].mxu0
          %631 = vmatprep.mubr.bf16.mxu0 0
          %632 = vmatmul.mubr.bf16.gmra.mrb[0].mxu0 %v513
          %v633 = vpop.f32.mrb[0].mxu0
          %v634 = vadd.f32 0.0, %v633
          %v635 = vpop.f32.mrb[0].mxu0
          %v636 = vpop.f32.mrb[0].mxu0
          %v637 = vadd.f32 0.0, %v636
          %v638 = vpop.f32.mrb[0].mxu0
          %639 = vmatprep.mubr.bf16.mxu0 0
          %640 = vmatmul.mubr.bf16.gmra.mrb[0].mxu0 %v514
          %v641 = vpop.f32.mrb[0].mxu0
          %v642 = vadd.f32 0.0, %v641
          %v643 = vpop.f32.mrb[0].mxu0
          %v644 = vpop.f32.mrb[0].mxu0
          %v645 = vadd.f32 0.0, %v644
          %v646 = vpop.f32.mrb[0].mxu0
          %647 = vmatprep.mubr.bf16.mxu0 0
          %648 = vmatmul.mubr.bf16.gmra.mrb[0].mxu0 %v515
          %v649 = vpop.f32.mrb[0].mxu0
          %v650 = vadd.f32 0.0, %v649
          %v651 = vpop.f32.mrb[0].mxu0
          %v652 = vpop.f32.mrb[0].mxu0
          %v653 = vadd.f32 0.0, %v652
          %v654 = vpop.f32.mrb[0].mxu0
          %655 = vmatprep.mubr.bf16.mxu0 0
          %656 = vmatmul.mubr.bf16.gmra.mrb[0].mxu0 %v516
          %v657 = vpop.f32.mrb[0].mxu0
          %v658 = vadd.f32 0.0, %v657
          %v659 = vpop.f32.mrb[0].mxu0
          %v660 = vpop.f32.mrb[0].mxu0
          %v661 = vadd.f32 0.0, %v660
          %v662 = vpop.f32.mrb[0].mxu0
          %663 = vmatprep.mubr.bf16.mxu0 0
          %664 = vmatmul.mubr.bf16.gmra.mrb[0].mxu0 %v517
          %v665 = vpop.f32.mrb[0].mxu0
          %v666 = vadd.f32 0.0, %v665
          %v667 = vpop.f32.mrb[0].mxu0
          %v668 = vpop.f32.mrb[0].mxu0
          %v669 = vadd.f32 0.0, %v668
          %v670 = vpop.f32.mrb[0].mxu0
          %671 = vmatprep.mubr.bf16.mxu0 0
          %672 = vmatmul.mubr.bf16.gmra.mrb[0].mxu0 %v518
          %v673 = vpop.f32.mrb[0].mxu0
          %v674 = vadd.f32 0.0, %v673
          %v675 = vpop.f32.mrb[0].mxu0
          %v676 = vpop.f32.mrb[0].mxu0
          %v677 = vadd.f32 0.0, %v676
          %v678 = vpop.f32.mrb[0].mxu0
          %679 = vdwg.mxu0
          %v680 = vpack.c.bf16 %v621, %v618
          %v681 = vpack.c.bf16 %v629, %v626
          %v682 = vpack.c.bf16 %v637, %v634
          %v683 = vpack.c.bf16 %v645, %v642
          %v684 = vpack.c.bf16 %v653, %v650
          %v685 = vpack.c.bf16 %v661, %v658
          %v686 = vpack.c.bf16 %v669, %v666
          %v687 = vpack.c.bf16 %v677, %v674
          %s688 = sshra.s32 %s254, 4
          %s689 = sand.u32 %s254, 15
          %s690 = smul.addr %s688, 8
          %s691 = scalar_lea.vmem [#allocation2], %s690
          %692 = vst [vmem:[%s691] sm:$0xff] %v680
          %693 = vst [vmem:[%s691 + $0x8] sm:$0xff] %v681
          %694 = vst [vmem:[%s691 + $0x10] sm:$0xff] %v682
          %695 = vst [vmem:[%s691 + $0x18] sm:$0xff] %v683
          %696 = vst [vmem:[%s691 + $0x20] sm:$0xff] %v684
          %697 = vst [vmem:[%s691 + $0x28] sm:$0xff] %v685
          %698 = vst [vmem:[%s691 + $0x30] sm:$0xff] %v686
          %699 = vst [vmem:[%s691 + $0x38] sm:$0xff] %v687
          %700 = vst [vmem:[#allocation9] sm:$0xff] 0.0
          %701 = vst [vmem:[#allocation9 + $0x8] sm:$0xff] 0.0
          %702 = vst [vmem:[#allocation9 + $0x10] sm:$0xff] 0.0
          %703 = vst [vmem:[#allocation9 + $0x18] sm:$0xff] 0.0
          %704 = vst [vmem:[#allocation9 + $0x20] sm:$0xff] 0.0
          %705 = vst [vmem:[#allocation9 + $0x28] sm:$0xff] 0.0
          %706 = vst [vmem:[#allocation9 + $0x30] sm:$0xff] 0.0
          %707 = vst [vmem:[#allocation9 + $0x38] sm:$0xff] 0.0
          %708 = vst [vmem:[#allocation9 + $0x40] sm:$0xff] 0.0
          %709 = vst [vmem:[#allocation9 + $0x48] sm:$0xff] 0.0
          %710 = vst [vmem:[#allocation9 + $0x50] sm:$0xff] 0.0
          %711 = vst [vmem:[#allocation9 + $0x58] sm:$0xff] 0.0
          %712 = vst [vmem:[#allocation9 + $0x60] sm:$0xff] 0.0
          %713 = vst [vmem:[#allocation9 + $0x68] sm:$0xff] 0.0
          %714 = vst [vmem:[#allocation9 + $0x70] sm:$0xff] 0.0
          %715 = vst [vmem:[#allocation9 + $0x78] sm:$0xff] 0.0
        $region56: #{tpu_custom_call.1} parent=39 // pred_fallthru
          _
        %p716 = scmp.eq.s32.totalorder %s23, 1
        // Predicated region
        $region57: #{tpu_custom_call.1} parent=39 // pred_check
          %p717 = pneg %p716
        $region58: #{tpu_custom_call.1} parent=39 // pred_check_branch
          %719 = sbr.rel (%p717) target = $region60
        $region59: #{tpu_custom_call.1} parent=39 // pred_region
          %s720 = sshra.s32 %s254, 3
          %s721 = sand.u32 %s254, 7
          %s722 = smul.addr %s720, 4
          %s723 = scalar_lea.vmem [#allocation3], %s722
          %v724 = vld [vmem:[%s723] sm:$0xf]
          %v725 = vld [vmem:[%s723 + $0x4] sm:$0xf]
          %v726 = vld [vmem:[%s723 + $0x8] sm:$0xf]
          %v727 = vld [vmem:[%s723 + $0xc] sm:$0xf]
          %v728 = vld [vmem:[%s723 + $0x10] sm:$0xf]
          %v729 = vld [vmem:[%s723 + $0x14] sm:$0xf]
          %v730 = vld [vmem:[%s723 + $0x18] sm:$0xf]
          %v731 = vld [vmem:[%s723 + $0x1c] sm:$0xf]
          %v732 = vld [vmem:[%s723 + $0x20] sm:$0xf]
          %v733 = vld [vmem:[%s723 + $0x24] sm:$0xf]
          %v734 = vld [vmem:[%s723 + $0x28] sm:$0xf]
          %v735 = vld [vmem:[%s723 + $0x2c] sm:$0xf]
          %v736 = vld [vmem:[%s723 + $0x30] sm:$0xf]
          %v737 = vld [vmem:[%s723 + $0x34] sm:$0xf]
          %v738 = vld [vmem:[%s723 + $0x38] sm:$0xf]
          %v739 = vld [vmem:[%s723 + $0x3c] sm:$0xf]
          %v740 = vld [vmem:[#allocation2] sm:$0xff]
          %v741 = vld [vmem:[#allocation2 + $0x8] sm:$0xff]
          %v742 = vld [vmem:[#allocation2 + $0x10] sm:$0xff]
          %v743 = vld [vmem:[#allocation2 + $0x18] sm:$0xff]
          %v744 = vld [vmem:[#allocation2 + $0x20] sm:$0xff]
          %v745 = vld [vmem:[#allocation2 + $0x28] sm:$0xff]
          %v746 = vld [vmem:[#allocation2 + $0x30] sm:$0xff]
          %v747 = vld [vmem:[#allocation2 + $0x38] sm:$0xff]
          %v748 = vld [vmem:[%s4] sm:$0x1]
          %v750 = vlaneseq
          %v751 = vshrl.u32 %v750, 7
          %v752 = vsub.s32 0, %v751
          %v753 = vrot.slane %v748, %v752
          %v771 = vunpack.c.l.b16 %v724
          %v772 = vunpack.c.l.b16 %v725
          %v773 = vunpack.c.l.b16 %v726
          %v774 = vunpack.c.l.b16 %v727
          %v775 = vunpack.c.l.b16 %v728
          %v776 = vunpack.c.l.b16 %v729
          %v777 = vunpack.c.l.b16 %v730
          %v778 = vunpack.c.l.b16 %v731
          %v779 = vunpack.c.l.b16 %v732
          %v780 = vunpack.c.l.b16 %v733
          %v781 = vunpack.c.l.b16 %v734
          %v782 = vunpack.c.l.b16 %v735
          %v783 = vunpack.c.l.b16 %v736
          %v784 = vunpack.c.l.b16 %v737
          %v785 = vunpack.c.l.b16 %v738
          %v786 = vunpack.c.l.b16 %v739
          %v787 = vpack.c.b16 %v772, %v771
          %v788 = vpack.c.b16 %v774, %v773
          %v789 = vpack.c.b16 %v776, %v775
          %v790 = vpack.c.b16 %v778, %v777
          %v791 = vpack.c.b16 %v780, %v779
          %v792 = vpack.c.b16 %v782, %v781
          %v793 = vpack.c.b16 %v784, %v783
          %v794 = vpack.c.b16 %v786, %v785
          %803 = vmatprep.subr.bf16.mxu0 0
          %804 = vmatpush1.bf16.msra.mxu0 %v740
          %805 = vmatprep.subr.bf16.mxu0 0
          %806 = vmatpush1.bf16.msra.mxu0 %v741
          %807 = vmatprep.subr.bf16.mxu0 0
          %808 = vmatpush1.bf16.msra.mxu0 %v742
          %809 = vmatprep.subr.bf16.mxu0 0
          %810 = vmatpush1.bf16.msra.mxu0 %v743
          %811 = vmatprep.subr.bf16.mxu0 0
          %812 = vmatpush1.bf16.msra.mxu0 %v744
          %813 = vmatprep.subr.bf16.mxu0 0
          %814 = vmatpush1.bf16.msra.mxu0 %v745
          %815 = vmatprep.subr.bf16.mxu0 0
          %816 = vmatpush1.bf16.msra.mxu0 %v746
          %817 = vmatprep.subr.bf16.mxu0 0
          %818 = vmatpush1.bf16.msra.mxu0 %v747
          %819 = vmatprep.subr.bf16.mxu0 0
          %820 = vmatpush1.bf16.msra.mxu0 0
          %821 = vmatprep.subr.bf16.mxu0 0
          %822 = vmatpush1.bf16.msra.mxu0 0
          %823 = vmatprep.subr.bf16.mxu0 0
          %824 = vmatpush1.bf16.msra.mxu0 0
          %825 = vmatprep.subr.bf16.mxu0 0
          %826 = vmatpush1.bf16.msra.mxu0 0
          %827 = vmatprep.subr.bf16.mxu0 0
          %828 = vmatpush1.bf16.msra.mxu0 0
          %829 = vmatprep.subr.bf16.mxu0 0
          %830 = vmatpush1.bf16.msra.mxu0 0
          %831 = vmatprep.subr.bf16.mxu0 0
          %832 = vmatpush1.bf16.msra.mxu0 0
          %833 = vmatprep.subr.bf16.mxu0 0
          %834 = vmatpush1.bf16.msra.mxu0 0
          %835 = vmatprep.mubr.bf16.mxu0 0
          %836 = vmatmul.mubr.bf16.gmra.mrb[0].mxu0 %v787
          %v837 = vpop.f32.mrb[0].mxu0
          %v838 = vadd.f32 %v753, %v837
          %v839 = vpop.f32.mrb[0].mxu0
          %v840 = vpop.f32.mrb[0].mxu0
          %v841 = vadd.f32 %v753, %v840
          %v842 = vpop.f32.mrb[0].mxu0
          %843 = vmatprep.mubr.bf16.mxu0 0
          %844 = vmatmul.mubr.bf16.gmra.mrb[0].mxu0 %v788
          %v845 = vpop.f32.mrb[0].mxu0
          %v846 = vadd.f32 %v753, %v845
          %v847 = vpop.f32.mrb[0].mxu0
          %v848 = vpop.f32.mrb[0].mxu0
          %v849 = vadd.f32 %v753, %v848
          %v850 = vpop.f32.mrb[0].mxu0
          %851 = vmatprep.mubr.bf16.mxu0 0
          %852 = vmatmul.mubr.bf16.gmra.mrb[0].mxu0 %v789
          %v853 = vpop.f32.mrb[0].mxu0
          %v854 = vadd.f32 %v753, %v853
          %v855 = vpop.f32.mrb[0].mxu0
          %v856 = vpop.f32.mrb[0].mxu0
          %v857 = vadd.f32 %v753, %v856
          %v858 = vpop.f32.mrb[0].mxu0
          %859 = vmatprep.mubr.bf16.mxu0 0
          %860 = vmatmul.mubr.bf16.gmra.mrb[0].mxu0 %v790
          %v861 = vpop.f32.mrb[0].mxu0
          %v862 = vadd.f32 %v753, %v861
          %v863 = vpop.f32.mrb[0].mxu0
          %v864 = vpop.f32.mrb[0].mxu0
          %v865 = vadd.f32 %v753, %v864
          %v866 = vpop.f32.mrb[0].mxu0
          %867 = vmatprep.mubr.bf16.mxu0 0
          %868 = vmatmul.mubr.bf16.gmra.mrb[0].mxu0 %v791
          %v869 = vpop.f32.mrb[0].mxu0
          %v870 = vadd.f32 %v753, %v869
          %v871 = vpop.f32.mrb[0].mxu0
          %v872 = vpop.f32.mrb[0].mxu0
          %v873 = vadd.f32 %v753, %v872
          %v874 = vpop.f32.mrb[0].mxu0
          %875 = vmatprep.mubr.bf16.mxu0 0
          %876 = vmatmul.mubr.bf16.gmra.mrb[0].mxu0 %v792
          %v877 = vpop.f32.mrb[0].mxu0
          %v878 = vadd.f32 %v753, %v877
          %v879 = vpop.f32.mrb[0].mxu0
          %v880 = vpop.f32.mrb[0].mxu0
          %v881 = vadd.f32 %v753, %v880
          %v882 = vpop.f32.mrb[0].mxu0
          %883 = vmatprep.mubr.bf16.mxu0 0
          %884 = vmatmul.mubr.bf16.gmra.mrb[0].mxu0 %v793
          %v885 = vpop.f32.mrb[0].mxu0
          %v886 = vadd.f32 %v753, %v885
          %v887 = vpop.f32.mrb[0].mxu0
          %v888 = vpop.f32.mrb[0].mxu0
          %v889 = vadd.f32 %v753, %v888
          %v890 = vpop.f32.mrb[0].mxu0
          %891 = vmatprep.mubr.bf16.mxu0 0
          %892 = vmatmul.mubr.bf16.gmra.mrb[0].mxu0 %v794
          %v893 = vpop.f32.mrb[0].mxu0
          %v894 = vadd.f32 %v753, %v893
          %v895 = vpop.f32.mrb[0].mxu0
          %v896 = vpop.f32.mrb[0].mxu0
          %v897 = vadd.f32 %v753, %v896
          %v898 = vpop.f32.mrb[0].mxu0
          %899 = vdwg.mxu0
          %v900 = vlaneseq
          %v901 = vand.u32 %v900, 127
          %vm902 = vcmp.lt.s32.totalorder %v901, 8
          %v903 = vsel %vm902, %v838, -1e+30
          %v904 = vsel %vm902, %v841, -1e+30
          %v905 = vsel %vm902, %v846, -1e+30
          %v906 = vsel %vm902, %v849, -1e+30
          %v907 = vsel %vm902, %v854, -1e+30
          %v908 = vsel %vm902, %v857, -1e+30
          %v909 = vsel %vm902, %v862, -1e+30
          %v910 = vsel %vm902, %v865, -1e+30
          %v911 = vsel %vm902, %v870, -1e+30
          %v912 = vsel %vm902, %v873, -1e+30
          %v913 = vsel %vm902, %v878, -1e+30
          %v914 = vsel %vm902, %v881, -1e+30
          %v915 = vsel %vm902, %v886, -1e+30
          %v916 = vsel %vm902, %v889, -1e+30
          %v917 = vsel %vm902, %v894, -1e+30
          %v918 = vsel %vm902, %v897, -1e+30
          %919 = vmax.xlane.f32.xlu0 %v903
          %v920 = vpop.xlane.xlu0 %919
          %921 = vmax.xlane.f32.xlu0 %v904
          %v922 = vpop.xlane.xlu0 %921
          %923 = vmax.xlane.f32.xlu0 %v905
          %v924 = vpop.xlane.xlu0 %923
          %925 = vmax.xlane.f32.xlu0 %v906
          %v926 = vpop.xlane.xlu0 %925
          %927 = vmax.xlane.f32.xlu0 %v907
          %v928 = vpop.xlane.xlu0 %927
          %929 = vmax.xlane.f32.xlu0 %v908
          %v930 = vpop.xlane.xlu0 %929
          %931 = vmax.xlane.f32.xlu0 %v909
          %v932 = vpop.xlane.xlu0 %931
          %933 = vmax.xlane.f32.xlu0 %v910
          %v934 = vpop.xlane.xlu0 %933
          %935 = vmax.xlane.f32.xlu0 %v911
          %v936 = vpop.xlane.xlu0 %935
          %937 = vmax.xlane.f32.xlu0 %v912
          %v938 = vpop.xlane.xlu0 %937
          %939 = vmax.xlane.f32.xlu0 %v913
          %v940 = vpop.xlane.xlu0 %939
          %941 = vmax.xlane.f32.xlu0 %v914
          %v942 = vpop.xlane.xlu0 %941
          %943 = vmax.xlane.f32.xlu0 %v915
          %v944 = vpop.xlane.xlu0 %943
          %945 = vmax.xlane.f32.xlu0 %v916
          %v946 = vpop.xlane.xlu0 %945
          %947 = vmax.xlane.f32.xlu0 %v917
          %v948 = vpop.xlane.xlu0 %947
          %949 = vmax.xlane.f32.xlu0 %v918
          %v950 = vpop.xlane.xlu0 %949
          %v951 = vsub.f32 %v903, %v920
          %v952 = vsub.f32 %v904, %v922
          %v953 = vsub.f32 %v905, %v924
          %v954 = vsub.f32 %v906, %v926
          %v955 = vsub.f32 %v907, %v928
          %v956 = vsub.f32 %v908, %v930
          %v957 = vsub.f32 %v909, %v932
          %v958 = vsub.f32 %v910, %v934
          %v959 = vsub.f32 %v911, %v936
          %v960 = vsub.f32 %v912, %v938
          %v961 = vsub.f32 %v913, %v940
          %v962 = vsub.f32 %v914, %v942
          %v963 = vsub.f32 %v915, %v944
          %v964 = vsub.f32 %v916, %v946
          %v965 = vsub.f32 %v917, %v948
          %v966 = vsub.f32 %v918, %v950
          %v967 = vmul.f32 %v951, 1.442695
          %v968 = vpow.pop %v967
          %v969 = vmul.f32 %v952, 1.442695
          %v970 = vpow.pop %v969
          %v971 = vmul.f32 %v953, 1.442695
          %v972 = vpow.pop %v971
          %v973 = vmul.f32 %v954, 1.442695
          %v974 = vpow.pop %v973
          %v975 = vmul.f32 %v955, 1.442695
          %v976 = vpow.pop %v975
          %v977 = vmul.f32 %v956, 1.442695
          %v978 = vpow.pop %v977
          %v979 = vmul.f32 %v957, 1.442695
          %v980 = vpow.pop %v979
          %v981 = vmul.f32 %v958, 1.442695
          %v982 = vpow.pop %v981
          %v983 = vmul.f32 %v959, 1.442695
          %v984 = vpow.pop %v983
          %v985 = vmul.f32 %v960, 1.442695
          %v986 = vpow.pop %v985
          %v987 = vmul.f32 %v961, 1.442695
          %v988 = vpow.pop %v987
          %v989 = vmul.f32 %v962, 1.442695
          %v990 = vpow.pop %v989
          %v991 = vmul.f32 %v963, 1.442695
          %v992 = vpow.pop %v991
          %v993 = vmul.f32 %v964, 1.442695
          %v994 = vpow.pop %v993
          %v995 = vmul.f32 %v965, 1.442695
          %v996 = vpow.pop %v995
          %v997 = vmul.f32 %v966, 1.442695
          %v998 = vpow.pop %v997
          %999 = vadd.xlane.f32.xlu0 %v968
          %v1000 = vpop.xlane.xlu0 %999
          %1001 = vadd.xlane.f32.xlu0 %v970
          %v1002 = vpop.xlane.xlu0 %1001
          %1003 = vadd.xlane.f32.xlu0 %v972
          %v1004 = vpop.xlane.xlu0 %1003
          %1005 = vadd.xlane.f32.xlu0 %v974
          %v1006 = vpop.xlane.xlu0 %1005
          %1007 = vadd.xlane.f32.xlu0 %v976
          %v1008 = vpop.xlane.xlu0 %1007
          %1009 = vadd.xlane.f32.xlu0 %v978
          %v1010 = vpop.xlane.xlu0 %1009
          %1011 = vadd.xlane.f32.xlu0 %v980
          %v1012 = vpop.xlane.xlu0 %1011
          %1013 = vadd.xlane.f32.xlu0 %v982
          %v1014 = vpop.xlane.xlu0 %1013
          %1015 = vadd.xlane.f32.xlu0 %v984
          %v1016 = vpop.xlane.xlu0 %1015
          %1017 = vadd.xlane.f32.xlu0 %v986
          %v1018 = vpop.xlane.xlu0 %1017
          %1019 = vadd.xlane.f32.xlu0 %v988
          %v1020 = vpop.xlane.xlu0 %1019
          %1021 = vadd.xlane.f32.xlu0 %v990
          %v1022 = vpop.xlane.xlu0 %1021
          %1023 = vadd.xlane.f32.xlu0 %v992
          %v1024 = vpop.xlane.xlu0 %1023
          %1025 = vadd.xlane.f32.xlu0 %v994
          %v1026 = vpop.xlane.xlu0 %1025
          %1027 = vadd.xlane.f32.xlu0 %v996
          %v1028 = vpop.xlane.xlu0 %1027
          %1029 = vadd.xlane.f32.xlu0 %v998
          %v1030 = vpop.xlane.xlu0 %1029
          %v1031 = vlog2.pop %v1000
          %v1032 = vmul.f32 %v1031, 0.6931472
          %v1033 = vlog2.pop %v1002
          %v1034 = vmul.f32 %v1033, 0.6931472
          %v1035 = vlog2.pop %v1004
          %v1036 = vmul.f32 %v1035, 0.6931472
          %v1037 = vlog2.pop %v1006
          %v1038 = vmul.f32 %v1037, 0.6931472
          %v1039 = vlog2.pop %v1008
          %v1040 = vmul.f32 %v1039, 0.6931472
          %v1041 = vlog2.pop %v1010
          %v1042 = vmul.f32 %v1041, 0.6931472
          %v1043 = vlog2.pop %v1012
          %v1044 = vmul.f32 %v1043, 0.6931472
          %v1045 = vlog2.pop %v1014
          %v1046 = vmul.f32 %v1045, 0.6931472
          %v1047 = vlog2.pop %v1016
          %v1048 = vmul.f32 %v1047, 0.6931472
          %v1049 = vlog2.pop %v1018
          %v1050 = vmul.f32 %v1049, 0.6931472
          %v1051 = vlog2.pop %v1020
          %v1052 = vmul.f32 %v1051, 0.6931472
          %v1053 = vlog2.pop %v1022
          %v1054 = vmul.f32 %v1053, 0.6931472
          %v1055 = vlog2.pop %v1024
          %v1056 = vmul.f32 %v1055, 0.6931472
          %v1057 = vlog2.pop %v1026
          %v1058 = vmul.f32 %v1057, 0.6931472
          %v1059 = vlog2.pop %v1028
          %v1060 = vmul.f32 %v1059, 0.6931472
          %v1061 = vlog2.pop %v1030
          %v1062 = vmul.f32 %v1061, 0.6931472
          %v1063 = vsub.f32 %v951, %v1032
          %v1064 = vsub.f32 %v952, %v1034
          %v1065 = vsub.f32 %v953, %v1036
          %v1066 = vsub.f32 %v954, %v1038
          %v1067 = vsub.f32 %v955, %v1040
          %v1068 = vsub.f32 %v956, %v1042
          %v1069 = vsub.f32 %v957, %v1044
          %v1070 = vsub.f32 %v958, %v1046
          %v1071 = vsub.f32 %v959, %v1048
          %v1072 = vsub.f32 %v960, %v1050
          %v1073 = vsub.f32 %v961, %v1052
          %v1074 = vsub.f32 %v962, %v1054
          %v1075 = vsub.f32 %v963, %v1056
          %v1076 = vsub.f32 %v964, %v1058
          %v1077 = vsub.f32 %v965, %v1060
          %v1078 = vsub.f32 %v966, %v1062
          %1079 = vst [vmem:[#allocation9] sm:$0xff] %v1063
          %1080 = vst [vmem:[#allocation9 + $0x8] sm:$0xff] %v1064
          %1081 = vst [vmem:[#allocation9 + $0x10] sm:$0xff] %v1065
          %1082 = vst [vmem:[#allocation9 + $0x18] sm:$0xff] %v1066
          %1083 = vst [vmem:[#allocation9 + $0x20] sm:$0xff] %v1067
          %1084 = vst [vmem:[#allocation9 + $0x28] sm:$0xff] %v1068
          %1085 = vst [vmem:[#allocation9 + $0x30] sm:$0xff] %v1069
          %1086 = vst [vmem:[#allocation9 + $0x38] sm:$0xff] %v1070
          %1087 = vst [vmem:[#allocation9 + $0x40] sm:$0xff] %v1071
          %1088 = vst [vmem:[#allocation9 + $0x48] sm:$0xff] %v1072
          %1089 = vst [vmem:[#allocation9 + $0x50] sm:$0xff] %v1073
          %1090 = vst [vmem:[#allocation9 + $0x58] sm:$0xff] %v1074
          %1091 = vst [vmem:[#allocation9 + $0x60] sm:$0xff] %v1075
          %1092 = vst [vmem:[#allocation9 + $0x68] sm:$0xff] %v1076
          %1093 = vst [vmem:[#allocation9 + $0x70] sm:$0xff] %v1077
          %1094 = vst [vmem:[#allocation9 + $0x78] sm:$0xff] %v1078
        $region60: #{tpu_custom_call.1} parent=39 // pred_fallthru
          _
        // Predicated region
        $region61: #{tpu_custom_call.1} parent=39 // pred_check
          %p1095 = pneg %p154
        $region62: #{tpu_custom_call.1} parent=39 // pred_check_branch
          %1097 = sbr.rel (%p1095) target = $region64
        $region63: #{tpu_custom_call.1} parent=39 // pred_region
          %s1098 = smul.u32 16, %s24
          %s1100 = ssub.s32 2048, 2048
          %1101 = vsyncadd [#allocation5], %s1100
          %s1102 = smul.addr %s1098, 128
          %s1103 = scalar_lea.hbm %s5, %s1102
          %s1104 = sshll.u32 [#allocation9], 4
          %s1105 = int_to_ptr.vmem [resolvable:$true] %s1104
          %1110 = dma.vmem_to_hbm [thread:$0]  %s1105, 2048, %s1103, [#allocation5], 128, 128, 8
        $region64: #{tpu_custom_call.1} parent=39 // pred_fallthru
          _
        // Predicated region
        $region65: #{tpu_custom_call.1} parent=39 // pred_check
          %p1111 = pneg %p154
        $region66: #{tpu_custom_call.1} parent=39 // pred_check_branch
          %1113 = sbr.rel (%p1111) target = $region68
        $region67: #{tpu_custom_call.1} parent=39 // pred_region
          %1114 = dma.done [#allocation5], 2048
        $region68: #{tpu_custom_call.1} parent=39 // pred_fallthru
          _
      $region40: #{tpu_custom_call.1} parent=5 // pred_fallthru
        _
      %p1115 = scmp.le.s32.totalorder 2, %s14
      // Predicated region
      $region69: #{tpu_custom_call.1} parent=5 // pred_check
        %p1116 = pneg %p1115
      $region70: #{tpu_custom_call.1} parent=5 // pred_check_branch
        %1118 = sbr.rel (%p1116) target = $region72
      $region71: #{tpu_custom_call.1} parent=5 // pred_region
        %s1119 = ssub.s32 %s14, 2
      $region72: #{tpu_custom_call.1} parent=5 // pred_fallthru
        _
    $region6: #{tpu_custom_call.1} parent=1 // loop_footer
      %s18 = sadd.s32 1, %s14
    $region7: #{tpu_custom_call.1} parent=1 // loop_footer_branch
      %13 = sbr.rel target = $region3
    $region8: #{tpu_custom_call.1} parent=1 // loop_exit
      _
    %1120 = vsyncpa [#allocation4], 1
    %s1121 = scalar_lea.sflag [#allocation4], 1
    %1122 = vsyncpa %s1121, 1
    %1123 = vsyncpa [#allocation7], 1
    %1124 = vsyncpa [#allocation5], 1
    %s1125 = scalar_lea.sflag [#allocation5], 1
    %1126 = vsyncpa %s1125, 1

// kernel: tpu_custom_call.1
$region0: #{tpu_custom_call.1}
  #allocation0 [shape = 'u32[]', space=smem, size = 0x4, offset = 0x4, fixed_abs, tag = 'smem constant byte address 0x4 - core index']
  #allocation1 [shape = 'u32[144,128]{1,0:T(1,128)}', space=vmem, size = 0x12000, scoped, tag = 'internal scratch']
  #allocation2 [shape = 'bf16[128,128]{1,0:T(16,128)(2,1)}', space=vmem, size = 0x8000, scoped, tag = 'scratch operand']
  %s0 = inlined_call_operand.hbm [shape: bf16[128,128], index: 0, kind: input, shape index: {}]
  %s1 = inlined_call_operand.hbm [shape: bf16[128,128], index: 1, kind: input, shape index: {}]
  %s2 = inlined_call_operand.hbm [shape: bf16[128,128], index: 2, kind: input, shape index: {}]
  %s3 = inlined_call_operand.vmem [shape: f32[1,128], index: 3, kind: input, shape index: {}]
  %s4 = inlined_call_operand.vmem [shape: f32[1,128], index: 4, kind: input, shape index: {}]
  %s5 = inlined_call_operand.hbm [shape: f32[128,128], index: 5, kind: output, shape index: {}]
  %s6 = sld [smem:[#allocation0]]
  $region73: #{tpu_custom_call.1} parent=0
    _
  %s8 = ssub.s32 1, %s6
  %s9 = scalar_select 0, %s8, %s6
  $region1: #{tpu_custom_call.1} parent=0
    #allocation3 [shape = 'u8[32768]{0}', space=vmem, size = 0x8000, scoped, tag = 'input window, operand 0, single buffered']
    #allocation4 [shape = 's32[2]{0}', space=sflag, size = 0x8, scoped, tag = 'scoped memory for tpu_custom_call.1']
    #allocation5 [shape = 's32[2]{0}', space=sflag, size = 0x8, scoped, tag = 'scoped memory for tpu_custom_call.1']
    #allocation6 [shape = 'u8[32768]{0}', space=vmem, size = 0x8000, scoped, tag = 'input window, operand 1, single buffered']
    #allocation7 [shape = 's32[1]{0}', space=sflag, size = 0x4, scoped, tag = 'scoped memory for tpu_custom_call.1']
    #allocation8 [shape = 'u8[32768]{0}', space=vmem, size = 0x8000, scoped, tag = 'input window, operand 2, single buffered']
    #allocation9 [shape = 'u8[65536]{0}', space=vmem, size = 0x10000, scoped, tag = 'output window, operand 0, single buffered']
    %10 = vsyncpa [#allocation4], 0
    %11 = vsyncpa [#allocation7], 0
    %12 = vsyncpa [#allocation5], 0
    loop: start=0, step=1, limit=4
    $region2: #{tpu_custom_call.1} parent=1 // loop_pre_header
      _
    $region3: #{tpu_custom_call.1} parent=1 // loop_header
      %s14 = sphi 0, %s18
      %p15 = scmp.ge.s32.totalorder %s14, 4
      %s21 = sphi 0, %s33
      %s22 = sphi 0, %s29
      %s23 = sphi 0, %s21
      %s24 = sphi 0, %s22
      %s25 = sphi 0, %s23
      %s26 = sphi 0, %s24
      %s34 = sphi 0, %s34
      %s36 = sphi 0, %s34
      %s37 = sphi 0, %s36
      %s51 = sphi 0, %s37
      %s55 = sphi 0, %s55
      %s57 = sphi 0, %s55
      %s58 = sphi 0, %s57
      %s72 = sphi 0, %s58
      %s76 = sphi 0, %s76
      %s78 = sphi 0, %s76
      %s79 = sphi 0, %s78
      %s93 = sphi 0, %s79
      %s97 = sphi 0, %s97
      %s99 = sphi 0, %s97
      %s100 = sphi 0, %s99
      %s114 = sphi 0, %s100
      %s118 = sphi 0, %s118
      %s120 = sphi 0, %s118
      %s121 = sphi 0, %s120
      %s135 = sphi 0, %s121
      %s141 = sphi 0, %s143
      %s144 = sphi 0, %s141
      %s145 = sphi 0, %s144
      %s161 = sphi 0, %s145
    $region4: #{tpu_custom_call.1} parent=1 // loop_header_branch
      %17 = sbr.rel (%p15) target = $region8
    $region5: #{tpu_custom_call.1} parent=1 // loop_body
      %s19 = ssub.s32 %s14, 1
      %s20 = ssub.s32 %s14, 2
      %s27 = sadd.s32 1, %s22
      %p28 = scmp.ge.s32.totalorder %s27, 1
      %s29 = scalar_select %p28, 0, %s27
      %s30 = sadd.s32 1, %s21
      %s31 = scalar_select %p28, %s30, %s21
      %p32 = scmp.ge.s32.totalorder %s31, 2
      %s33 = scalar_select %p32, 0, %s31
      %s35 = sadd.s32 %s34, 1
      %p38 = scmp.eq.s32.totalorder %s14, 1
      %p39 = scmp.ne.s32.totalorder %s34, %s36
      %p40 = scmp.eq.s32.totalorder %s14, 0
      %p41 = por %p39, %p40
      %p42 = scmp.ne.s32.totalorder %s34, %s36
      %p43 = scmp.eq.s32.totalorder %s19, 1
      %p44 = por %p42, %p43
      %p45 = scmp.ne.s32.totalorder %s36, %s37
      %p46 = scmp.eq.s32.totalorder %s19, 0
      %p47 = por %p45, %p46
      %p48 = scmp.ne.s32.totalorder %s36, %s37
      %p49 = scmp.eq.s32.totalorder %s20, 1
      %p50 = por %p48, %p49
      %p52 = scmp.ne.s32.totalorder %s37, %s51
      %p53 = scmp.eq.s32.totalorder %s20, 0
      %p54 = por %p52, %p53
      %s56 = sadd.s32 %s55, 1
      %p59 = scmp.eq.s32.totalorder %s14, 1
      %p60 = scmp.ne.s32.totalorder %s55, %s57
      %p61 = scmp.eq.s32.totalorder %s14, 0
      %p62 = por %p60, %p61
      %p63 = scmp.ne.s32.totalorder %s55, %s57
      %p64 = scmp.eq.s32.totalorder %s19, 1
      %p65 = por %p63, %p64
      %p66 = scmp.ne.s32.totalorder %s57, %s58
      %p67 = scmp.eq.s32.totalorder %s19, 0
      %p68 = por %p66, %p67
      %p69 = scmp.ne.s32.totalorder %s57, %s58
      %p70 = scmp.eq.s32.totalorder %s20, 1
      %p71 = por %p69, %p70
      %p73 = scmp.ne.s32.totalorder %s58, %s72
      %p74 = scmp.eq.s32.totalorder %s20, 0
      %p75 = por %p73, %p74
      %s77 = sadd.s32 %s76, 1
      %p80 = scmp.eq.s32.totalorder %s14, 1
      %p81 = scmp.ne.s32.totalorder %s76, %s78
      %p82 = scmp.eq.s32.totalorder %s14, 0
      %p83 = por %p81, %p82
      %p84 = scmp.ne.s32.totalorder %s76, %s78
      %p85 = scmp.eq.s32.totalorder %s19, 1
      %p86 = por %p84, %p85
      %p87 = scmp.ne.s32.totalorder %s78, %s79
      %p88 = scmp.eq.s32.totalorder %s19, 0
      %p89 = por %p87, %p88
      %p90 = scmp.ne.s32.totalorder %s78, %s79
      %p91 = scmp.eq.s32.totalorder %s20, 1
      %p92 = por %p90, %p91
      %p94 = scmp.ne.s32.totalorder %s79, %s93
      %p95 = scmp.eq.s32.totalorder %s20, 0
      %p96 = por %p94, %p95
      %s98 = sadd.s32 %s97, 1
      %p101 = scmp.eq.s32.totalorder %s14, 1
      %p102 = scmp.ne.s32.totalorder %s97, %s99
      %p103 = scmp.eq.s32.totalorder %s14, 0
      %p104 = por %p102, %p103
      %p105 = scmp.ne.s32.totalorder %s97, %s99
      %p106 = scmp.eq.s32.totalorder %s19, 1
      %p107 = por %p105, %p106
      %p108 = scmp.ne.s32.totalorder %s99, %s100
      %p109 = scmp.eq.s32.totalorder %s19, 0
      %p110 = por %p108, %p109
      %p111 = scmp.ne.s32.totalorder %s99, %s100
      %p112 = scmp.eq.s32.totalorder %s20, 1
      %p113 = por %p111, %p112
      %p115 = scmp.ne.s32.totalorder %s100, %s114
      %p116 = scmp.eq.s32.totalorder %s20, 0
      %p117 = por %p115, %p116
      %s119 = sadd.s32 %s118, 1
      %p122 = scmp.eq.s32.totalorder %s14, 1
      %p123 = scmp.ne.s32.totalorder %s118, %s120
      %p124 = scmp.eq.s32.totalorder %s14, 0
      %p125 = por %p123, %p124
      %p126 = scmp.ne.s32.totalorder %s118, %s120
      %p127 = scmp.eq.s32.totalorder %s19, 1
      %p128 = por %p126, %p127
      %p129 = scmp.ne.s32.totalorder %s120, %s121
      %p130 = scmp.eq.s32.totalorder %s19, 0
      %p131 = por %p129, %p130
      %p132 = scmp.ne.s32.totalorder %s120, %s121
      %p133 = scmp.eq.s32.totalorder %s20, 1
      %p134 = por %p132, %p133
      %p136 = scmp.ne.s32.totalorder %s121, %s135
      %p137 = scmp.eq.s32.totalorder %s20, 0
      %p138 = por %p136, %p137
      %s139 = ssub.s32 %s22, %s29
      %p140 = scmp.eq.s32.totalorder %s139, 0
      %s142 = sadd.s32 %s141, 1
      %s143 = scalar_select %p140, %s141, %s142
      %p146 = pneg %p140
      %p147 = scmp.eq.s32.totalorder %s14, 1
      %p148 = por %p146, %p147
      %p149 = scmp.ne.s32.totalorder %s141, %s144
      %p150 = scmp.eq.s32.totalorder %s14, 0
      %p151 = por %p149, %p150
      %p152 = scmp.ne.s32.totalorder %s141, %s144
      %p153 = scmp.eq.s32.totalorder %s19, 1
      %p154 = por %p152, %p153
      %p155 = scmp.ne.s32.totalorder %s144, %s145
      %p156 = scmp.eq.s32.totalorder %s19, 0
      %p157 = por %p155, %p156
      %p158 = scmp.ne.s32.totalorder %s144, %s145
      %p159 = scmp.eq.s32.totalorder %s20, 1
      %p160 = por %p158, %p159
      %p162 = scmp.ne.s32.totalorder %s145, %s161
      %p163 = scmp.eq.s32.totalorder %s20, 0
      %p164 = por %p162, %p163
      %p165 = scmp.le.s32.totalorder 1, %s14
      %p166 = scmp.lt.s32.totalorder %s14, 3
      %p167 = pnand %p165, %p166
      %p168 = pneg %p167
      // Predicated region
      $region9: #{tpu_custom_call.1} parent=5 // pred_check
        _
      $region10: #{tpu_custom_call.1} parent=5 // pred_check_branch
        %170 = sbr.rel (%p167) target = $region12
      $region11: #{tpu_custom_call.1} parent=5 // pred_region
        %s171 = ssub.s32 %s14, 1
        // Predicated region
        $region13: #{tpu_custom_call.1} parent=11 // pred_check
          %p172 = pneg %p47
        $region14: #{tpu_custom_call.1} parent=11 // pred_check_branch
          %174 = sbr.rel (%p172) target = $region16
        $region15: #{tpu_custom_call.1} parent=11 // pred_region
          %s176 = ssub.s32 1024, 1024
          %177 = vsyncadd [#allocation4], %s176
          %s178 = sshll.u32 [#allocation3], 4
          %s179 = int_to_ptr.vmem [resolvable:$true] %s178
          %184 = dma.hbm_to_vmem [thread:$0]  %s0, 1024, %s179, [#allocation4], 64, 64, 4
        $region16: #{tpu_custom_call.1} parent=11 // pred_fallthru
          _
        // Predicated region
        $region17: #{tpu_custom_call.1} parent=11 // pred_check
          %p185 = pneg %p68
        $region18: #{tpu_custom_call.1} parent=11 // pred_check_branch
          %187 = sbr.rel (%p185) target = $region20
        $region19: #{tpu_custom_call.1} parent=11 // pred_region
          %s189 = ssub.s32 1024, 1024
          %190 = vsyncadd [#allocation7], %s189
          %s191 = sshll.u32 [#allocation6], 4
          %s192 = int_to_ptr.vmem [resolvable:$true] %s191
          %197 = dma.hbm_to_vmem [thread:$0]  %s1, 1024, %s192, [#allocation7], 64, 64, 4
        $region20: #{tpu_custom_call.1} parent=11 // pred_fallthru
          _
        // Predicated region
        $region21: #{tpu_custom_call.1} parent=11 // pred_check
          %p198 = pneg %p89
        $region22: #{tpu_custom_call.1} parent=11 // pred_check_branch
          %200 = sbr.rel (%p198) target = $region24
        $region23: #{tpu_custom_call.1} parent=11 // pred_region
          %s202 = ssub.s32 1024, 1024
          %203 = vsyncadd [#allocation7], %s202
          %s204 = sshll.u32 [#allocation8], 4
          %s205 = int_to_ptr.vmem [resolvable:$true] %s204
          %210 = dma.hbm_to_vmem [thread:$0]  %s2, 1024, %s205, [#allocation7], 64, 64, 4
        $region24: #{tpu_custom_call.1} parent=11 // pred_fallthru
          _
        // Predicated region
        $region25: #{tpu_custom_call.1} parent=11 // pred_check
          %p211 = pneg %p110
        $region26: #{tpu_custom_call.1} parent=11 // pred_check_branch
          %213 = sbr.rel (%p211) target = $region28
        $region27: #{tpu_custom_call.1} parent=11 // pred_region
          _
        $region28: #{tpu_custom_call.1} parent=11 // pred_fallthru
          _
        // Predicated region
        $region29: #{tpu_custom_call.1} parent=11 // pred_check
          %p214 = pneg %p131
        $region30: #{tpu_custom_call.1} parent=11 // pred_check_branch
          %216 = sbr.rel (%p214) target = $region32
        $region31: #{tpu_custom_call.1} parent=11 // pred_region
          _
        $region32: #{tpu_custom_call.1} parent=11 // pred_fallthru
          _
      $region12: #{tpu_custom_call.1} parent=5 // pred_fallthru
        _
      %p217 = scmp.lt.s32.totalorder %s14, 2
      // Predicated region
      $region33: #{tpu_custom_call.1} parent=5 // pred_check
        %p218 = pneg %p217
      $region34: #{tpu_custom_call.1} parent=5 // pred_check_branch
        %220 = sbr.rel (%p218) target = $region36
      $region35: #{tpu_custom_call.1} parent=5 // pred_region
        _
      $region36: #{tpu_custom_call.1} parent=5 // pred_fallthru
        _
      %p221 = scmp.le.s32.totalorder 1, %s14
      %p222 = scmp.lt.s32.totalorder %s14, 3
      %p223 = pnand %p221, %p222
      %p224 = pneg %p223
      // Predicated region
      $region37: #{tpu_custom_call.1} parent=5 // pred_check
        _
      $region38: #{tpu_custom_call.1} parent=5 // pred_check_branch
        %226 = sbr.rel (%p223) target = $region40
      $region39: #{tpu_custom_call.1} parent=5 // pred_region
        %s227 = ssub.s32 %s14, 1
        // Predicated region
        $region41: #{tpu_custom_call.1} parent=39 // pred_check
          %p228 = pneg %p47
        $region42: #{tpu_custom_call.1} parent=39 // pred_check_branch
          %230 = sbr.rel (%p228) target = $region44
        $region43: #{tpu_custom_call.1} parent=39 // pred_region
          %231 = dma.done [#allocation4], 1024
        $region44: #{tpu_custom_call.1} parent=39 // pred_fallthru
          _
        // Predicated region
        $region45: #{tpu_custom_call.1} parent=39 // pred_check
          %p232 = pneg %p68
        $region46: #{tpu_custom_call.1} parent=39 // pred_check_branch
          %234 = sbr.rel (%p232) target = $region48
        $region47: #{tpu_custom_call.1} parent=39 // pred_region
          %235 = dma.done [#allocation7], 1024
        $region48: #{tpu_custom_call.1} parent=39 // pred_fallthru
          _
        // Predicated region
        $region49: #{tpu_custom_call.1} parent=39 // pred_check
          %p236 = pneg %p89
        $region50: #{tpu_custom_call.1} parent=39 // pred_check_branch
          %238 = sbr.rel (%p236) target = $region52
        $region51: #{tpu_custom_call.1} parent=39 // pred_region
          %239 = dma.done [#allocation7], 1024
        $region52: #{tpu_custom_call.1} parent=39 // pred_fallthru
          _
        %p240 = pneg %p47
        %p241 = pneg %p44
        %p242 = pneg %p68
        %p243 = pneg %p65
        %p244 = pneg %p89
        %p245 = pneg %p86
        %p246 = pneg %p110
        %p247 = pneg %p107
        %p248 = pneg %p131
        %p249 = pneg %p128
        %p250 = pneg %p157
        %p251 = pneg %p154
        %s252 = smul.u32 16, %s24
        %s254 = smul.u32 %s24, 128
        %p255 = scmp.eq.s32.totalorder %s23, 0
        // Predicated region
        $region53: #{tpu_custom_call.1} parent=39 // pred_check
          %p256 = pneg %p255
        $region54: #{tpu_custom_call.1} parent=39 // pred_check_branch
          %258 = sbr.rel (%p256) target = $region56
        $region55: #{tpu_custom_call.1} parent=39 // pred_region
          %s259 = sshra.s32 %s254, 3
          %s260 = sand.u32 %s254, 7
          %s261 = smul.addr %s259, 4
          %s262 = scalar_lea.vmem [#allocation3], %s261
          %v263 = vld [vmem:[%s262] sm:$0xf]
          %v264 = vld [vmem:[%s262 + $0x4] sm:$0xf]
          %v265 = vld [vmem:[%s262 + $0x8] sm:$0xf]
          %v266 = vld [vmem:[%s262 + $0xc] sm:$0xf]
          %v267 = vld [vmem:[%s262 + $0x10] sm:$0xf]
          %v268 = vld [vmem:[%s262 + $0x14] sm:$0xf]
          %v269 = vld [vmem:[%s262 + $0x18] sm:$0xf]
          %v270 = vld [vmem:[%s262 + $0x1c] sm:$0xf]
          %v271 = vld [vmem:[%s262 + $0x20] sm:$0xf]
          %v272 = vld [vmem:[%s262 + $0x24] sm:$0xf]
          %v273 = vld [vmem:[%s262 + $0x28] sm:$0xf]
          %v274 = vld [vmem:[%s262 + $0x2c] sm:$0xf]
          %v275 = vld [vmem:[%s262 + $0x30] sm:$0xf]
          %v276 = vld [vmem:[%s262 + $0x34] sm:$0xf]
          %v277 = vld [vmem:[%s262 + $0x38] sm:$0xf]
          %v278 = vld [vmem:[%s262 + $0x3c] sm:$0xf]
          %v279 = vld [vmem:[#allocation6] sm:$0xf]
          %v280 = vld [vmem:[#allocation6 + $0x4] sm:$0xf]
          %v281 = vld [vmem:[#allocation6 + $0x8] sm:$0xf]
          %v282 = vld [vmem:[#allocation6 + $0xc] sm:$0xf]
          %v283 = vld [vmem:[#allocation6 + $0x10] sm:$0xf]
          %v284 = vld [vmem:[#allocation6 + $0x14] sm:$0xf]
          %v285 = vld [vmem:[#allocation6 + $0x18] sm:$0xf]
          %v286 = vld [vmem:[#allocation6 + $0x1c] sm:$0xf]
          %v287 = vld [vmem:[#allocation6 + $0x20] sm:$0xf]
          %v288 = vld [vmem:[#allocation6 + $0x24] sm:$0xf]
          %v289 = vld [vmem:[#allocation6 + $0x28] sm:$0xf]
          %v290 = vld [vmem:[#allocation6 + $0x2c] sm:$0xf]
          %v291 = vld [vmem:[#allocation6 + $0x30] sm:$0xf]
          %v292 = vld [vmem:[#allocation6 + $0x34] sm:$0xf]
          %v293 = vld [vmem:[#allocation6 + $0x38] sm:$0xf]
          %v294 = vld [vmem:[#allocation6 + $0x3c] sm:$0xf]
          %v295 = vld [vmem:[%s3] sm:$0x1]
          %v297 = vlaneseq
          %v298 = vshrl.u32 %v297, 7
          %v299 = vsub.s32 0, %v298
          %v300 = vrot.slane %v295, %v299
          %v318 = vunpack.c.l.b16 %v263
          %v319 = vunpack.c.l.b16 %v264
          %v320 = vunpack.c.l.b16 %v265
          %v321 = vunpack.c.l.b16 %v266
          %v322 = vunpack.c.l.b16 %v267
          %v323 = vunpack.c.l.b16 %v268
          %v324 = vunpack.c.l.b16 %v269
          %v325 = vunpack.c.l.b16 %v270
          %v326 = vunpack.c.l.b16 %v271
          %v327 = vunpack.c.l.b16 %v272
          %v328 = vunpack.c.l.b16 %v273
          %v329 = vunpack.c.l.b16 %v274
          %v330 = vunpack.c.l.b16 %v275
          %v331 = vunpack.c.l.b16 %v276
          %v332 = vunpack.c.l.b16 %v277
          %v333 = vunpack.c.l.b16 %v278
          %v334 = vpack.c.b16 %v319, %v318
          %v335 = vpack.c.b16 %v321, %v320
          %v336 = vpack.c.b16 %v323, %v322
          %v337 = vpack.c.b16 %v325, %v324
          %v338 = vpack.c.b16 %v327, %v326
          %v339 = vpack.c.b16 %v329, %v328
          %v340 = vpack.c.b16 %v331, %v330
          %v341 = vpack.c.b16 %v333, %v332
          %v366 = vunpack.c.l.b16 %v279
          %v367 = vunpack.c.l.b16 %v280
          %v368 = vunpack.c.l.b16 %v281
          %v369 = vunpack.c.l.b16 %v282
          %v370 = vunpack.c.l.b16 %v283
          %v371 = vunpack.c.l.b16 %v284
          %v372 = vunpack.c.l.b16 %v285
          %v373 = vunpack.c.l.b16 %v286
          %v374 = vunpack.c.l.b16 %v287
          %v375 = vunpack.c.l.b16 %v288
          %v376 = vunpack.c.l.b16 %v289
          %v377 = vunpack.c.l.b16 %v290
          %v378 = vunpack.c.l.b16 %v291
          %v379 = vunpack.c.l.b16 %v292
          %v380 = vunpack.c.l.b16 %v293
          %v381 = vunpack.c.l.b16 %v294
          %v382 = vpack.c.b16 %v367, %v366
          %v383 = vpack.c.b16 %v369, %v368
          %v384 = vpack.c.b16 %v371, %v370
          %v385 = vpack.c.b16 %v373, %v372
          %v386 = vpack.c.b16 %v375, %v374
          %v387 = vpack.c.b16 %v377, %v376
          %v388 = vpack.c.b16 %v379, %v378
          %v389 = vpack.c.b16 %v381, %v380
          %398 = vmatprep.subr.bf16.mxu0 0
          %399 = vmatpush1.bf16.msra.mxu0 %v382
          %400 = vmatprep.subr.bf16.mxu0 0
          %401 = vmatpush1.bf16.msra.mxu0 %v383
          %402 = vmatprep.subr.bf16.mxu0 0
          %403 = vmatpush1.bf16.msra.mxu0 %v384
          %404 = vmatprep.subr.bf16.mxu0 0
          %405 = vmatpush1.bf16.msra.mxu0 %v385
          %406 = vmatprep.subr.bf16.mxu0 0
          %407 = vmatpush1.bf16.msra.mxu0 %v386
          %408 = vmatprep.subr.bf16.mxu0 0
          %409 = vmatpush1.bf16.msra.mxu0 %v387
          %410 = vmatprep.subr.bf16.mxu0 0
          %411 = vmatpush1.bf16.msra.mxu0 %v388
          %412 = vmatprep.subr.bf16.mxu0 0
          %413 = vmatpush1.bf16.msra.mxu0 %v389
          %414 = vmatprep.subr.bf16.mxu0 0
          %415 = vmatpush1.bf16.msra.mxu0 0
          %416 = vmatprep.subr.bf16.mxu0 0
          %417 = vmatpush1.bf16.msra.mxu0 0
          %418 = vmatprep.subr.bf16.mxu0 0
          %419 = vmatpush1.bf16.msra.mxu0 0
          %420 = vmatprep.subr.bf16.mxu0 0
          %421 = vmatpush1.bf16.msra.mxu0 0
          %422 = vmatprep.subr.bf16.mxu0 0
          %423 = vmatpush1.bf16.msra.mxu0 0
          %424 = vmatprep.subr.bf16.mxu0 0
          %425 = vmatpush1.bf16.msra.mxu0 0
          %426 = vmatprep.subr.bf16.mxu0 0
          %427 = vmatpush1.bf16.msra.mxu0 0
          %428 = vmatprep.subr.bf16.mxu0 0
          %429 = vmatpush1.bf16.msra.mxu0 0
          %430 = vmatprep.mubr.bf16.mxu0 0
          %431 = vmatmul.mubr.bf16.gmra.mrb[0].mxu0 %v334
          %v432 = vpop.f32.mrb[0].mxu0
          %v433 = vadd.f32 %v300, %v432
          %v434 = vpop.f32.mrb[0].mxu0
          %v435 = vpop.f32.mrb[0].mxu0
          %v436 = vadd.f32 %v300, %v435
          %v437 = vpop.f32.mrb[0].mxu0
          %438 = vmatprep.mubr.bf16.mxu0 0
          %439 = vmatmul.mubr.bf16.gmra.mrb[0].mxu0 %v335
          %v440 = vpop.f32.mrb[0].mxu0
          %v441 = vadd.f32 %v300, %v440
          %v442 = vpop.f32.mrb[0].mxu0
          %v443 = vpop.f32.mrb[0].mxu0
          %v444 = vadd.f32 %v300, %v443
          %v445 = vpop.f32.mrb[0].mxu0
          %446 = vmatprep.mubr.bf16.mxu0 0
          %447 = vmatmul.mubr.bf16.gmra.mrb[0].mxu0 %v336
          %v448 = vpop.f32.mrb[0].mxu0
          %v449 = vadd.f32 %v300, %v448
          %v450 = vpop.f32.mrb[0].mxu0
          %v451 = vpop.f32.mrb[0].mxu0
          %v452 = vadd.f32 %v300, %v451
          %v453 = vpop.f32.mrb[0].mxu0
          %454 = vmatprep.mubr.bf16.mxu0 0
          %455 = vmatmul.mubr.bf16.gmra.mrb[0].mxu0 %v337
          %v456 = vpop.f32.mrb[0].mxu0
          %v457 = vadd.f32 %v300, %v456
          %v458 = vpop.f32.mrb[0].mxu0
          %v459 = vpop.f32.mrb[0].mxu0
          %v460 = vadd.f32 %v300, %v459
          %v461 = vpop.f32.mrb[0].mxu0
          %462 = vmatprep.mubr.bf16.mxu0 0
          %463 = vmatmul.mubr.bf16.gmra.mrb[0].mxu0 %v338
          %v464 = vpop.f32.mrb[0].mxu0
          %v465 = vadd.f32 %v300, %v464
          %v466 = vpop.f32.mrb[0].mxu0
          %v467 = vpop.f32.mrb[0].mxu0
          %v468 = vadd.f32 %v300, %v467
          %v469 = vpop.f32.mrb[0].mxu0
          %470 = vmatprep.mubr.bf16.mxu0 0
          %471 = vmatmul.mubr.bf16.gmra.mrb[0].mxu0 %v339
          %v472 = vpop.f32.mrb[0].mxu0
          %v473 = vadd.f32 %v300, %v472
          %v474 = vpop.f32.mrb[0].mxu0
          %v475 = vpop.f32.mrb[0].mxu0
          %v476 = vadd.f32 %v300, %v475
          %v477 = vpop.f32.mrb[0].mxu0
          %478 = vmatprep.mubr.bf16.mxu0 0
          %479 = vmatmul.mubr.bf16.gmra.mrb[0].mxu0 %v340
          %v480 = vpop.f32.mrb[0].mxu0
          %v481 = vadd.f32 %v300, %v480
          %v482 = vpop.f32.mrb[0].mxu0
          %v483 = vpop.f32.mrb[0].mxu0
          %v484 = vadd.f32 %v300, %v483
          %v485 = vpop.f32.mrb[0].mxu0
          %486 = vmatprep.mubr.bf16.mxu0 0
          %487 = vmatmul.mubr.bf16.gmra.mrb[0].mxu0 %v341
          %v488 = vpop.f32.mrb[0].mxu0
          %v489 = vadd.f32 %v300, %v488
          %v490 = vpop.f32.mrb[0].mxu0
          %v491 = vpop.f32.mrb[0].mxu0
          %v492 = vadd.f32 %v300, %v491
          %v493 = vpop.f32.mrb[0].mxu0
          %494 = vdwg.mxu0
          %v495 = vmax.f32 %v433, 0.0
          %v496 = vmax.f32 %v436, 0.0
          %v497 = vmax.f32 %v441, 0.0
          %v498 = vmax.f32 %v444, 0.0
          %v499 = vmax.f32 %v449, 0.0
          %v500 = vmax.f32 %v452, 0.0
          %v501 = vmax.f32 %v457, 0.0
          %v502 = vmax.f32 %v460, 0.0
          %v503 = vmax.f32 %v465, 0.0
          %v504 = vmax.f32 %v468, 0.0
          %v505 = vmax.f32 %v473, 0.0
          %v506 = vmax.f32 %v476, 0.0
          %v507 = vmax.f32 %v481, 0.0
          %v508 = vmax.f32 %v484, 0.0
          %v509 = vmax.f32 %v489, 0.0
          %v510 = vmax.f32 %v492, 0.0
          %v511 = vpack.c.bf16 %v496, %v495
          %v512 = vpack.c.bf16 %v498, %v497
          %v513 = vpack.c.bf16 %v500, %v499
          %v514 = vpack.c.bf16 %v502, %v501
          %v515 = vpack.c.bf16 %v504, %v503
          %v516 = vpack.c.bf16 %v506, %v505
          %v517 = vpack.c.bf16 %v508, %v507
          %v518 = vpack.c.bf16 %v510, %v509
          %v519 = vld [vmem:[#allocation8] sm:$0xf]
          %v520 = vld [vmem:[#allocation8 + $0x4] sm:$0xf]
          %v521 = vld [vmem:[#allocation8 + $0x8] sm:$0xf]
          %v522 = vld [vmem:[#allocation8 + $0xc] sm:$0xf]
          %v523 = vld [vmem:[#allocation8 + $0x10] sm:$0xf]
          %v524 = vld [vmem:[#allocation8 + $0x14] sm:$0xf]
          %v525 = vld [vmem:[#allocation8 + $0x18] sm:$0xf]
          %v526 = vld [vmem:[#allocation8 + $0x1c] sm:$0xf]
          %v527 = vld [vmem:[#allocation8 + $0x20] sm:$0xf]
          %v528 = vld [vmem:[#allocation8 + $0x24] sm:$0xf]
          %v529 = vld [vmem:[#allocation8 + $0x28] sm:$0xf]
          %v530 = vld [vmem:[#allocation8 + $0x2c] sm:$0xf]
          %v531 = vld [vmem:[#allocation8 + $0x30] sm:$0xf]
          %v532 = vld [vmem:[#allocation8 + $0x34] sm:$0xf]
          %v533 = vld [vmem:[#allocation8 + $0x38] sm:$0xf]
          %v534 = vld [vmem:[#allocation8 + $0x3c] sm:$0xf]
          %v551 = vunpack.c.l.b16 %v519
          %v552 = vunpack.c.l.b16 %v520
          %v553 = vunpack.c.l.b16 %v521
          %v554 = vunpack.c.l.b16 %v522
          %v555 = vunpack.c.l.b16 %v523
          %v556 = vunpack.c.l.b16 %v524
          %v557 = vunpack.c.l.b16 %v525
          %v558 = vunpack.c.l.b16 %v526
          %v559 = vunpack.c.l.b16 %v527
          %v560 = vunpack.c.l.b16 %v528
          %v561 = vunpack.c.l.b16 %v529
          %v562 = vunpack.c.l.b16 %v530
          %v563 = vunpack.c.l.b16 %v531
          %v564 = vunpack.c.l.b16 %v532
          %v565 = vunpack.c.l.b16 %v533
          %v566 = vunpack.c.l.b16 %v534
          %v567 = vpack.c.b16 %v552, %v551
          %v568 = vpack.c.b16 %v554, %v553
          %v569 = vpack.c.b16 %v556, %v555
          %v570 = vpack.c.b16 %v558, %v557
          %v571 = vpack.c.b16 %v560, %v559
          %v572 = vpack.c.b16 %v562, %v561
          %v573 = vpack.c.b16 %v564, %v563
          %v574 = vpack.c.b16 %v566, %v565
          %583 = vmatprep.subr.bf16.mxu0 0
          %584 = vmatpush1.bf16.msra.mxu0 %v567
          %585 = vmatprep.subr.bf16.mxu0 0
          %586 = vmatpush1.bf16.msra.mxu0 %v568
          %587 = vmatprep.subr.bf16.mxu0 0
          %588 = vmatpush1.bf16.msra.mxu0 %v569
          %589 = vmatprep.subr.bf16.mxu0 0
          %590 = vmatpush1.bf16.msra.mxu0 %v570
          %591 = vmatprep.subr.bf16.mxu0 0
          %592 = vmatpush1.bf16.msra.mxu0 %v571
          %593 = vmatprep.subr.bf16.mxu0 0
          %594 = vmatpush1.bf16.msra.mxu0 %v572
          %595 = vmatprep.subr.bf16.mxu0 0
          %596 = vmatpush1.bf16.msra.mxu0 %v573
          %597 = vmatprep.subr.bf16.mxu0 0
          %598 = vmatpush1.bf16.msra.mxu0 %v574
          %599 = vmatprep.subr.bf16.mxu0 0
          %600 = vmatpush1.bf16.msra.mxu0 0
          %601 = vmatprep.subr.bf16.mxu0 0
          %602 = vmatpush1.bf16.msra.mxu0 0
          %603 = vmatprep.subr.bf16.mxu0 0
          %604 = vmatpush1.bf16.msra.mxu0 0
          %605 = vmatprep.subr.bf16.mxu0 0
          %606 = vmatpush1.bf16.msra.mxu0 0
          %607 = vmatprep.subr.bf16.mxu0 0
          %608 = vmatpush1.bf16.msra.mxu0 0
          %609 = vmatprep.subr.bf16.mxu0 0
          %610 = vmatpush1.bf16.msra.mxu0 0
          %611 = vmatprep.subr.bf16.mxu0 0
          %612 = vmatpush1.bf16.msra.mxu0 0
          %613 = vmatprep.subr.bf16.mxu0 0
          %614 = vmatpush1.bf16.msra.mxu0 0
          %615 = vmatprep.mubr.bf16.mxu0 0
          %616 = vmatmul.mubr.bf16.gmra.mrb[0].mxu0 %v511
          %v617 = vpop.f32.mrb[0].mxu0
          %v618 = vadd.f32 0.0, %v617
          %v619 = vpop.f32.mrb[0].mxu0
          %v620 = vpop.f32.mrb[0].mxu0
          %v621 = vadd.f32 0.0, %v620
          %v622 = vpop.f32.mrb[0].mxu0
          %623 = vmatprep.mubr.bf16.mxu0 0
          %624 = vmatmul.mubr.bf16.gmra.mrb[0].mxu0 %v512
          %v625 = vpop.f32.mrb[0].mxu0
          %v626 = vadd.f32 0.0, %v625
          %v627 = vpop.f32.mrb[0].mxu0
          %v628 = vpop.f32.mrb[0].mxu0
          %v629 = vadd.f32 0.0, %v628
          %v630 = vpop.f32.mrb[0].mxu0
          %631 = vmatprep.mubr.bf16.mxu0 0
          %632 = vmatmul.mubr.bf16.gmra.mrb[0].mxu0 %v513
          %v633 = vpop.f32.mrb[0].mxu0
          %v634 = vadd.f32 0.0, %v633
          %v635 = vpop.f32.mrb[0].mxu0
          %v636 = vpop.f32.mrb[0].mxu0
          %v637 = vadd.f32 0.0, %v636
          %v638 = vpop.f32.mrb[0].mxu0
          %639 = vmatprep.mubr.bf16.mxu0 0
          %640 = vmatmul.mubr.bf16.gmra.mrb[0].mxu0 %v514
          %v641 = vpop.f32.mrb[0].mxu0
          %v642 = vadd.f32 0.0, %v641
          %v643 = vpop.f32.mrb[0].mxu0
          %v644 = vpop.f32.mrb[0].mxu0
          %v645 = vadd.f32 0.0, %v644
          %v646 = vpop.f32.mrb[0].mxu0
          %647 = vmatprep.mubr.bf16.mxu0 0
          %648 = vmatmul.mubr.bf16.gmra.mrb[0].mxu0 %v515
          %v649 = vpop.f32.mrb[0].mxu0
          %v650 = vadd.f32 0.0, %v649
          %v651 = vpop.f32.mrb[0].mxu0
          %v652 = vpop.f32.mrb[0].mxu0
          %v653 = vadd.f32 0.0, %v652
          %v654 = vpop.f32.mrb[0].mxu0
          %655 = vmatprep.mubr.bf16.mxu0 0
          %656 = vmatmul.mubr.bf16.gmra.mrb[0].mxu0 %v516
          %v657 = vpop.f32.mrb[0].mxu0
          %v658 = vadd.f32 0.0, %v657
          %v659 = vpop.f32.mrb[0].mxu0
          %v660 = vpop.f32.mrb[0].mxu0
          %v661 = vadd.f32 0.0, %v660
          %v662 = vpop.f32.mrb[0].mxu0
          %663 = vmatprep.mubr.bf16.mxu0 0
          %664 = vmatmul.mubr.bf16.gmra.mrb[0].mxu0 %v517
          %v665 = vpop.f32.mrb[0].mxu0
          %v666 = vadd.f32 0.0, %v665
          %v667 = vpop.f32.mrb[0].mxu0
          %v668 = vpop.f32.mrb[0].mxu0
          %v669 = vadd.f32 0.0, %v668
          %v670 = vpop.f32.mrb[0].mxu0
          %671 = vmatprep.mubr.bf16.mxu0 0
          %672 = vmatmul.mubr.bf16.gmra.mrb[0].mxu0 %v518
          %v673 = vpop.f32.mrb[0].mxu0
          %v674 = vadd.f32 0.0, %v673
          %v675 = vpop.f32.mrb[0].mxu0
          %v676 = vpop.f32.mrb[0].mxu0
          %v677 = vadd.f32 0.0, %v676
          %v678 = vpop.f32.mrb[0].mxu0
          %679 = vdwg.mxu0
          %v680 = vpack.c.bf16 %v621, %v618
          %v681 = vpack.c.bf16 %v629, %v626
          %v682 = vpack.c.bf16 %v637, %v634
          %v683 = vpack.c.bf16 %v645, %v642
          %v684 = vpack.c.bf16 %v653, %v650
          %v685 = vpack.c.bf16 %v661, %v658
          %v686 = vpack.c.bf16 %v669, %v666
          %v687 = vpack.c.bf16 %v677, %v674
          %s688 = sshra.s32 %s254, 4
          %s689 = sand.u32 %s254, 15
          %s690 = smul.addr %s688, 8
          %s691 = scalar_lea.vmem [#allocation2], %s690
          %692 = vst [vmem:[%s691] sm:$0xff] %v680
          %693 = vst [vmem:[%s691 + $0x8] sm:$0xff] %v681
          %694 = vst [vmem:[%s691 + $0x10] sm:$0xff] %v682
          %695 = vst [vmem:[%s691 + $0x18] sm:$0xff] %v683
          %696 = vst [vmem:[%s691 + $0x20] sm:$0xff] %v684
          %697 = vst [vmem:[%s691 + $0x28] sm:$0xff] %v685
          %698 = vst [vmem:[%s691 + $0x30] sm:$0xff] %v686
          %699 = vst [vmem:[%s691 + $0x38] sm:$0xff] %v687
          %700 = vst [vmem:[#allocation9] sm:$0xff] 0.0
          %701 = vst [vmem:[#allocation9 + $0x8] sm:$0xff] 0.0
          %702 = vst [vmem:[#allocation9 + $0x10] sm:$0xff] 0.0
          %703 = vst [vmem:[#allocation9 + $0x18] sm:$0xff] 0.0
          %704 = vst [vmem:[#allocation9 + $0x20] sm:$0xff] 0.0
          %705 = vst [vmem:[#allocation9 + $0x28] sm:$0xff] 0.0
          %706 = vst [vmem:[#allocation9 + $0x30] sm:$0xff] 0.0
          %707 = vst [vmem:[#allocation9 + $0x38] sm:$0xff] 0.0
          %708 = vst [vmem:[#allocation9 + $0x40] sm:$0xff] 0.0
          %709 = vst [vmem:[#allocation9 + $0x48] sm:$0xff] 0.0
          %710 = vst [vmem:[#allocation9 + $0x50] sm:$0xff] 0.0
          %711 = vst [vmem:[#allocation9 + $0x58] sm:$0xff] 0.0
          %712 = vst [vmem:[#allocation9 + $0x60] sm:$0xff] 0.0
          %713 = vst [vmem:[#allocation9 + $0x68] sm:$0xff] 0.0
          %714 = vst [vmem:[#allocation9 + $0x70] sm:$0xff] 0.0
          %715 = vst [vmem:[#allocation9 + $0x78] sm:$0xff] 0.0
        $region56: #{tpu_custom_call.1} parent=39 // pred_fallthru
          _
        %p716 = scmp.eq.s32.totalorder %s23, 1
        // Predicated region
        $region57: #{tpu_custom_call.1} parent=39 // pred_check
          %p717 = pneg %p716
        $region58: #{tpu_custom_call.1} parent=39 // pred_check_branch
          %719 = sbr.rel (%p717) target = $region60
        $region59: #{tpu_custom_call.1} parent=39 // pred_region
          %s720 = sshra.s32 %s254, 3
          %s721 = sand.u32 %s254, 7
          %s722 = smul.addr %s720, 4
          %s723 = scalar_lea.vmem [#allocation3], %s722
          %v724 = vld [vmem:[%s723] sm:$0xf]
          %v725 = vld [vmem:[%s723 + $0x4] sm:$0xf]
          %v726 = vld [vmem:[%s723 + $0x8] sm:$0xf]
          %v727 = vld [vmem:[%s723 + $0xc] sm:$0xf]
          %v728 = vld [vmem:[%s723 + $0x10] sm:$0xf]
          %v729 = vld [vmem:[%s723 + $0x14] sm:$0xf]
          %v730 = vld [vmem:[%s723 + $0x18] sm:$0xf]
          %v731 = vld [vmem:[%s723 + $0x1c] sm:$0xf]
          %v732 = vld [vmem:[%s723 + $0x20] sm:$0xf]
          %v733 = vld [vmem:[%s723 + $0x24] sm:$0xf]
          %v734 = vld [vmem:[%s723 + $0x28] sm:$0xf]
          %v735 = vld [vmem:[%s723 + $0x2c] sm:$0xf]
          %v736 = vld [vmem:[%s723 + $0x30] sm:$0xf]
          %v737 = vld [vmem:[%s723 + $0x34] sm:$0xf]
          %v738 = vld [vmem:[%s723 + $0x38] sm:$0xf]
          %v739 = vld [vmem:[%s723 + $0x3c] sm:$0xf]
          %v740 = vld [vmem:[#allocation2] sm:$0xff]
          %v741 = vld [vmem:[#allocation2 + $0x8] sm:$0xff]
          %v742 = vld [vmem:[#allocation2 + $0x10] sm:$0xff]
          %v743 = vld [vmem:[#allocation2 + $0x18] sm:$0xff]
          %v744 = vld [vmem:[#allocation2 + $0x20] sm:$0xff]
          %v745 = vld [vmem:[#allocation2 + $0x28] sm:$0xff]
          %v746 = vld [vmem:[#allocation2 + $0x30] sm:$0xff]
          %v747 = vld [vmem:[#allocation2 + $0x38] sm:$0xff]
          %v748 = vld [vmem:[%s4] sm:$0x1]
          %v750 = vlaneseq
          %v751 = vshrl.u32 %v750, 7
          %v752 = vsub.s32 0, %v751
          %v753 = vrot.slane %v748, %v752
          %v771 = vunpack.c.l.b16 %v724
          %v772 = vunpack.c.l.b16 %v725
          %v773 = vunpack.c.l.b16 %v726
          %v774 = vunpack.c.l.b16 %v727
          %v775 = vunpack.c.l.b16 %v728
          %v776 = vunpack.c.l.b16 %v729
          %v777 = vunpack.c.l.b16 %v730
          %v778 = vunpack.c.l.b16 %v731
          %v779 = vunpack.c.l.b16 %v732
          %v780 = vunpack.c.l.b16 %v733
          %v781 = vunpack.c.l.b16 %v734
          %v782 = vunpack.c.l.b16 %v735
          %v783 = vunpack.c.l.b16 %v736
          %v784 = vunpack.c.l.b16 %v737
          %v785 = vunpack.c.l.b16 %v738
          %v786 = vunpack.c.l.b16 %v739
          %v787 = vpack.c.b16 %v772, %v771
          %v788 = vpack.c.b16 %v774, %v773
          %v789 = vpack.c.b16 %v776, %v775
          %v790 = vpack.c.b16 %v778, %v777
          %v791 = vpack.c.b16 %v780, %v779
          %v792 = vpack.c.b16 %v782, %v781
          %v793 = vpack.c.b16 %v784, %v783
          %v794 = vpack.c.b16 %v786, %v785
          %803 = vmatprep.subr.bf16.mxu0 0
          %804 = vmatpush1.bf16.msra.mxu0 %v740
          %805 = vmatprep.subr.bf16.mxu0 0
          %806 = vmatpush1.bf16.msra.mxu0 %v741
          %807 = vmatprep.subr.bf16.mxu0 0
          %808 = vmatpush1.bf16.msra.mxu0 %v742
          %809 = vmatprep.subr.bf16.mxu0 0
          %810 = vmatpush1.bf16.msra.mxu0 %v743
          %811 = vmatprep.subr.bf16.mxu0 0
          %812 = vmatpush1.bf16.msra.mxu0 %v744
          %813 = vmatprep.subr.bf16.mxu0 0
          %814 = vmatpush1.bf16.msra.mxu0 %v745
          %815 = vmatprep.subr.bf16.mxu0 0
          %816 = vmatpush1.bf16.msra.mxu0 %v746
          %817 = vmatprep.subr.bf16.mxu0 0
          %818 = vmatpush1.bf16.msra.mxu0 %v747
          %819 = vmatprep.subr.bf16.mxu0 0
          %820 = vmatpush1.bf16.msra.mxu0 0
          %821 = vmatprep.subr.bf16.mxu0 0
          %822 = vmatpush1.bf16.msra.mxu0 0
          %823 = vmatprep.subr.bf16.mxu0 0
          %824 = vmatpush1.bf16.msra.mxu0 0
          %825 = vmatprep.subr.bf16.mxu0 0
          %826 = vmatpush1.bf16.msra.mxu0 0
          %827 = vmatprep.subr.bf16.mxu0 0
          %828 = vmatpush1.bf16.msra.mxu0 0
          %829 = vmatprep.subr.bf16.mxu0 0
          %830 = vmatpush1.bf16.msra.mxu0 0
          %831 = vmatprep.subr.bf16.mxu0 0
          %832 = vmatpush1.bf16.msra.mxu0 0
          %833 = vmatprep.subr.bf16.mxu0 0
          %834 = vmatpush1.bf16.msra.mxu0 0
          %835 = vmatprep.mubr.bf16.mxu0 0
          %836 = vmatmul.mubr.bf16.gmra.mrb[0].mxu0 %v787
          %v837 = vpop.f32.mrb[0].mxu0
          %v838 = vadd.f32 %v753, %v837
          %v839 = vpop.f32.mrb[0].mxu0
          %v840 = vpop.f32.mrb[0].mxu0
          %v841 = vadd.f32 %v753, %v840
          %v842 = vpop.f32.mrb[0].mxu0
          %843 = vmatprep.mubr.bf16.mxu0 0
          %844 = vmatmul.mubr.bf16.gmra.mrb[0].mxu0 %v788
          %v845 = vpop.f32.mrb[0].mxu0
          %v846 = vadd.f32 %v753, %v845
          %v847 = vpop.f32.mrb[0].mxu0
          %v848 = vpop.f32.mrb[0].mxu0
          %v849 = vadd.f32 %v753, %v848
          %v850 = vpop.f32.mrb[0].mxu0
          %851 = vmatprep.mubr.bf16.mxu0 0
          %852 = vmatmul.mubr.bf16.gmra.mrb[0].mxu0 %v789
          %v853 = vpop.f32.mrb[0].mxu0
          %v854 = vadd.f32 %v753, %v853
          %v855 = vpop.f32.mrb[0].mxu0
          %v856 = vpop.f32.mrb[0].mxu0
          %v857 = vadd.f32 %v753, %v856
          %v858 = vpop.f32.mrb[0].mxu0
          %859 = vmatprep.mubr.bf16.mxu0 0
          %860 = vmatmul.mubr.bf16.gmra.mrb[0].mxu0 %v790
          %v861 = vpop.f32.mrb[0].mxu0
          %v862 = vadd.f32 %v753, %v861
          %v863 = vpop.f32.mrb[0].mxu0
          %v864 = vpop.f32.mrb[0].mxu0
          %v865 = vadd.f32 %v753, %v864
          %v866 = vpop.f32.mrb[0].mxu0
          %867 = vmatprep.mubr.bf16.mxu0 0
          %868 = vmatmul.mubr.bf16.gmra.mrb[0].mxu0 %v791
          %v869 = vpop.f32.mrb[0].mxu0
          %v870 = vadd.f32 %v753, %v869
          %v871 = vpop.f32.mrb[0].mxu0
          %v872 = vpop.f32.mrb[0].mxu0
          %v873 = vadd.f32 %v753, %v872
          %v874 = vpop.f32.mrb[0].mxu0
          %875 = vmatprep.mubr.bf16.mxu0 0
          %876 = vmatmul.mubr.bf16.gmra.mrb[0].mxu0 %v792
          %v877 = vpop.f32.mrb[0].mxu0
          %v878 = vadd.f32 %v753, %v877
          %v879 = vpop.f32.mrb[0].mxu0
          %v880 = vpop.f32.mrb[0].mxu0
          %v881 = vadd.f32 %v753, %v880
          %v882 = vpop.f32.mrb[0].mxu0
          %883 = vmatprep.mubr.bf16.mxu0 0
          %884 = vmatmul.mubr.bf16.gmra.mrb[0].mxu0 %v793
          %v885 = vpop.f32.mrb[0].mxu0
          %v886 = vadd.f32 %v753, %v885
          %v887 = vpop.f32.mrb[0].mxu0
          %v888 = vpop.f32.mrb[0].mxu0
          %v889 = vadd.f32 %v753, %v888
          %v890 = vpop.f32.mrb[0].mxu0
          %891 = vmatprep.mubr.bf16.mxu0 0
          %892 = vmatmul.mubr.bf16.gmra.mrb[0].mxu0 %v794
          %v893 = vpop.f32.mrb[0].mxu0
          %v894 = vadd.f32 %v753, %v893
          %v895 = vpop.f32.mrb[0].mxu0
          %v896 = vpop.f32.mrb[0].mxu0
          %v897 = vadd.f32 %v753, %v896
          %v898 = vpop.f32.mrb[0].mxu0
          %899 = vdwg.mxu0
          %v900 = vlaneseq
          %v901 = vand.u32 %v900, 127
          %vm902 = vcmp.lt.s32.totalorder %v901, 8
          %v903 = vsel %vm902, %v838, -1e+30
          %v904 = vsel %vm902, %v841, -1e+30
          %v905 = vsel %vm902, %v846, -1e+30
          %v906 = vsel %vm902, %v849, -1e+30
          %v907 = vsel %vm902, %v854, -1e+30
          %v908 = vsel %vm902, %v857, -1e+30
          %v909 = vsel %vm902, %v862, -1e+30
          %v910 = vsel %vm902, %v865, -1e+30
          %v911 = vsel %vm902, %v870, -1e+30
          %v912 = vsel %vm902, %v873, -1e+30
          %v913 = vsel %vm902, %v878, -1e+30
          %v914 = vsel %vm902, %v881, -1e+30
          %v915 = vsel %vm902, %v886, -1e+30
          %v916 = vsel %vm902, %v889, -1e+30
          %v917 = vsel %vm902, %v894, -1e+30
          %v918 = vsel %vm902, %v897, -1e+30
          %919 = vmax.xlane.f32.xlu0 %v903
          %v920 = vpop.xlane.xlu0 %919
          %921 = vmax.xlane.f32.xlu0 %v904
          %v922 = vpop.xlane.xlu0 %921
          %923 = vmax.xlane.f32.xlu0 %v905
          %v924 = vpop.xlane.xlu0 %923
          %925 = vmax.xlane.f32.xlu0 %v906
          %v926 = vpop.xlane.xlu0 %925
          %927 = vmax.xlane.f32.xlu0 %v907
          %v928 = vpop.xlane.xlu0 %927
          %929 = vmax.xlane.f32.xlu0 %v908
          %v930 = vpop.xlane.xlu0 %929
          %931 = vmax.xlane.f32.xlu0 %v909
          %v932 = vpop.xlane.xlu0 %931
          %933 = vmax.xlane.f32.xlu0 %v910
          %v934 = vpop.xlane.xlu0 %933
          %935 = vmax.xlane.f32.xlu0 %v911
          %v936 = vpop.xlane.xlu0 %935
          %937 = vmax.xlane.f32.xlu0 %v912
          %v938 = vpop.xlane.xlu0 %937
          %939 = vmax.xlane.f32.xlu0 %v913
          %v940 = vpop.xlane.xlu0 %939
          %941 = vmax.xlane.f32.xlu0 %v914
          %v942 = vpop.xlane.xlu0 %941
          %943 = vmax.xlane.f32.xlu0 %v915
          %v944 = vpop.xlane.xlu0 %943
          %945 = vmax.xlane.f32.xlu0 %v916
          %v946 = vpop.xlane.xlu0 %945
          %947 = vmax.xlane.f32.xlu0 %v917
          %v948 = vpop.xlane.xlu0 %947
          %949 = vmax.xlane.f32.xlu0 %v918
          %v950 = vpop.xlane.xlu0 %949
          %v951 = vsub.f32 %v903, %v920
          %v952 = vsub.f32 %v904, %v922
          %v953 = vsub.f32 %v905, %v924
          %v954 = vsub.f32 %v906, %v926
          %v955 = vsub.f32 %v907, %v928
          %v956 = vsub.f32 %v908, %v930
          %v957 = vsub.f32 %v909, %v932
          %v958 = vsub.f32 %v910, %v934
          %v959 = vsub.f32 %v911, %v936
          %v960 = vsub.f32 %v912, %v938
          %v961 = vsub.f32 %v913, %v940
          %v962 = vsub.f32 %v914, %v942
          %v963 = vsub.f32 %v915, %v944
          %v964 = vsub.f32 %v916, %v946
          %v965 = vsub.f32 %v917, %v948
          %v966 = vsub.f32 %v918, %v950
          %v967 = vmul.f32 %v951, 1.442695
          %v968 = vpow.pop %v967
          %v969 = vmul.f32 %v952, 1.442695
          %v970 = vpow.pop %v969
          %v971 = vmul.f32 %v953, 1.442695
          %v972 = vpow.pop %v971
          %v973 = vmul.f32 %v954, 1.442695
          %v974 = vpow.pop %v973
          %v975 = vmul.f32 %v955, 1.442695
          %v976 = vpow.pop %v975
          %v977 = vmul.f32 %v956, 1.442695
          %v978 = vpow.pop %v977
          %v979 = vmul.f32 %v957, 1.442695
          %v980 = vpow.pop %v979
          %v981 = vmul.f32 %v958, 1.442695
          %v982 = vpow.pop %v981
          %v983 = vmul.f32 %v959, 1.442695
          %v984 = vpow.pop %v983
          %v985 = vmul.f32 %v960, 1.442695
          %v986 = vpow.pop %v985
          %v987 = vmul.f32 %v961, 1.442695
          %v988 = vpow.pop %v987
          %v989 = vmul.f32 %v962, 1.442695
          %v990 = vpow.pop %v989
          %v991 = vmul.f32 %v963, 1.442695
          %v992 = vpow.pop %v991
          %v993 = vmul.f32 %v964, 1.442695
          %v994 = vpow.pop %v993
          %v995 = vmul.f32 %v965, 1.442695
          %v996 = vpow.pop %v995
          %v997 = vmul.f32 %v966, 1.442695
          %v998 = vpow.pop %v997
          %999 = vadd.xlane.f32.xlu0 %v968
          %v1000 = vpop.xlane.xlu0 %999
          %1001 = vadd.xlane.f32.xlu0 %v970
          %v1002 = vpop.xlane.xlu0 %1001
          %1003 = vadd.xlane.f32.xlu0 %v972
          %v1004 = vpop.xlane.xlu0 %1003
          %1005 = vadd.xlane.f32.xlu0 %v974
          %v1006 = vpop.xlane.xlu0 %1005
          %1007 = vadd.xlane.f32.xlu0 %v976
          %v1008 = vpop.xlane.xlu0 %1007
          %1009 = vadd.xlane.f32.xlu0 %v978
          %v1010 = vpop.xlane.xlu0 %1009
          %1011 = vadd.xlane.f32.xlu0 %v980
          %v1012 = vpop.xlane.xlu0 %1011
          %1013 = vadd.xlane.f32.xlu0 %v982
          %v1014 = vpop.xlane.xlu0 %1013
          %1015 = vadd.xlane.f32.xlu0 %v984
          %v1016 = vpop.xlane.xlu0 %1015
          %1017 = vadd.xlane.f32.xlu0 %v986
          %v1018 = vpop.xlane.xlu0 %1017
          %1019 = vadd.xlane.f32.xlu0 %v988
          %v1020 = vpop.xlane.xlu0 %1019
          %1021 = vadd.xlane.f32.xlu0 %v990
          %v1022 = vpop.xlane.xlu0 %1021
          %1023 = vadd.xlane.f32.xlu0 %v992
          %v1024 = vpop.xlane.xlu0 %1023
          %1025 = vadd.xlane.f32.xlu0 %v994
          %v1026 = vpop.xlane.xlu0 %1025
          %1027 = vadd.xlane.f32.xlu0 %v996
          %v1028 = vpop.xlane.xlu0 %1027
          %1029 = vadd.xlane.f32.xlu0 %v998
          %v1030 = vpop.xlane.xlu0 %1029
          %v1031 = vlog2.pop %v1000
          %v1032 = vmul.f32 %v1031, 0.6931472
          %v1033 = vlog2.pop %v1002
          %v1034 = vmul.f32 %v1033, 0.6931472
          %v1035 = vlog2.pop %v1004
          %v1036 = vmul.f32 %v1035, 0.6931472
          %v1037 = vlog2.pop %v1006
          %v1038 = vmul.f32 %v1037, 0.6931472
          %v1039 = vlog2.pop %v1008
          %v1040 = vmul.f32 %v1039, 0.6931472
          %v1041 = vlog2.pop %v1010
          %v1042 = vmul.f32 %v1041, 0.6931472
          %v1043 = vlog2.pop %v1012
          %v1044 = vmul.f32 %v1043, 0.6931472
          %v1045 = vlog2.pop %v1014
          %v1046 = vmul.f32 %v1045, 0.6931472
          %v1047 = vlog2.pop %v1016
          %v1048 = vmul.f32 %v1047, 0.6931472
          %v1049 = vlog2.pop %v1018
          %v1050 = vmul.f32 %v1049, 0.6931472
          %v1051 = vlog2.pop %v1020
          %v1052 = vmul.f32 %v1051, 0.6931472
          %v1053 = vlog2.pop %v1022
          %v1054 = vmul.f32 %v1053, 0.6931472
          %v1055 = vlog2.pop %v1024
          %v1056 = vmul.f32 %v1055, 0.6931472
          %v1057 = vlog2.pop %v1026
          %v1058 = vmul.f32 %v1057, 0.6931472
          %v1059 = vlog2.pop %v1028
          %v1060 = vmul.f32 %v1059, 0.6931472
          %v1061 = vlog2.pop %v1030
          %v1062 = vmul.f32 %v1061, 0.6931472
          %v1063 = vsub.f32 %v951, %v1032
          %v1064 = vsub.f32 %v952, %v1034
          %v1065 = vsub.f32 %v953, %v1036
          %v1066 = vsub.f32 %v954, %v1038
          %v1067 = vsub.f32 %v955, %v1040
          %v1068 = vsub.f32 %v956, %v1042
          %v1069 = vsub.f32 %v957, %v1044
          %v1070 = vsub.f32 %v958, %v1046
          %v1071 = vsub.f32 %v959, %v1048
          %v1072 = vsub.f32 %v960, %v1050
          %v1073 = vsub.f32 %v961, %v1052
          %v1074 = vsub.f32 %v962, %v1054
          %v1075 = vsub.f32 %v963, %v1056
          %v1076 = vsub.f32 %v964, %v1058
          %v1077 = vsub.f32 %v965, %v1060
          %v1078 = vsub.f32 %v966, %v1062
          %1079 = vst [vmem:[#allocation9] sm:$0xff] %v1063
          %1080 = vst [vmem:[#allocation9 + $0x8] sm:$0xff] %v1064
          %1081 = vst [vmem:[#allocation9 + $0x10] sm:$0xff] %v1065
          %1082 = vst [vmem:[#allocation9 + $0x18] sm:$0xff] %v1066
          %1083 = vst [vmem:[#allocation9 + $0x20] sm:$0xff] %v1067
          %1084 = vst [vmem:[#allocation9 + $0x28] sm:$0xff] %v1068
          %1085 = vst [vmem:[#allocation9 + $0x30] sm:$0xff] %v1069
          %1086 = vst [vmem:[#allocation9 + $0x38] sm:$0xff] %v1070
          %1087 = vst [vmem:[#allocation9 + $0x40] sm:$0xff] %v1071
          %1088 = vst [vmem:[#allocation9 + $0x48] sm:$0xff] %v1072
          %1089 = vst [vmem:[#allocation9 + $0x50] sm:$0xff] %v1073
          %1090 = vst [vmem:[#allocation9 + $0x58] sm:$0xff] %v1074
          %1091 = vst [vmem:[#allocation9 + $0x60] sm:$0xff] %v1075
          %1092 = vst [vmem:[#allocation9 + $0x68] sm:$0xff] %v1076
          %1093 = vst [vmem:[#allocation9 + $0x70] sm:$0xff] %v1077
          %1094 = vst [vmem:[#allocation9 + $0x78] sm:$0xff] %v1078
        $region60: #{tpu_custom_call.1} parent=39 // pred_fallthru
          _
        // Predicated region
        $region61: #{tpu_custom_call.1} parent=39 // pred_check
          %p1095 = pneg %p154
        $region62: #{tpu_custom_call.1} parent=39 // pred_check_branch
          %1097 = sbr.rel (%p1095) target = $region64
        $region63: #{tpu_custom_call.1} parent=39 // pred_region
          %s1098 = smul.u32 16, %s24
          %s1100 = ssub.s32 2048, 2048
          %1101 = vsyncadd [#allocation5], %s1100
          %s1102 = smul.addr %s1098, 128
          %s1103 = scalar_lea.hbm %s5, %s1102
          %s1104 = sshll.u32 [#allocation9], 4
          %s1105 = int_to_ptr.vmem [resolvable:$true] %s1104
          %1110 = dma.vmem_to_hbm [thread:$0]  %s1105, 2048, %s1103, [#allocation5], 128, 128, 8
        $region64: #{tpu_custom_call.1} parent=39 // pred_fallthru
          _
        // Predicated region
        $region65: #{tpu_custom_call.1} parent=39 // pred_check
          %p1111 = pneg %p154
        $region66: #{tpu_custom_call.1} parent=39 // pred_check_branch
          %1113 = sbr.rel (%p1111) target = $region68
        $region67: #{tpu_custom_call.1} parent=39 // pred_region
          %1114 = dma.done [#allocation5], 2048
        $region68: #{tpu_custom_call.1} parent=39 // pred_fallthru
          _
      $region40: #{tpu_custom_call.1} parent=5 // pred_fallthru
        _
      %p1115 = scmp.le.s32.totalorder 2, %s14
      // Predicated region
      $region69: #{tpu_custom_call.1} parent=5 // pred_check
        %p1116 = pneg %p1115
      $region70: #{tpu_custom_call.1} parent=5 // pred_check_branch
        %1118 = sbr.rel (%p1116) target = $region72
      $region71: #{tpu_custom_call.1} parent=5 // pred_region
        %s1119 = ssub.s32 %s14, 2
      $region72: #{tpu_custom_call.1} parent=5 // pred_fallthru
        _
    $region6: #{tpu_custom_call.1} parent=1 // loop_footer
      %s18 = sadd.s32 1, %s14
    $region7: #{tpu_custom_call.1} parent=1 // loop_footer_branch
      %13 = sbr.rel target = $region3
    $region8: #{tpu_custom_call.1} parent=1 // loop_exit
      _
    %1120 = vsyncpa [#allocation4], 1
    %s1121 = scalar_lea.sflag [#allocation4], 1
    %1122 = vsyncpa %s1121, 1
    %1123 = vsyncpa [#allocation7], 1
    %1124 = vsyncpa [#allocation5], 1
    %s1125 = scalar_lea.sflag [#allocation5], 1
    %1126 = vsyncpa %s1125, 1

</llo_original>
